<compile_context>
chip_gen: v7x
topology: tpu7x:2x2x1
jax: 0.10.0
libtpu: 0.0.40
codegen_flags: <defaults>
</compile_context>

<pallas_src>
import jax
import jax.numpy as jnp
from jax.experimental import pallas as pl
from jax.experimental.pallas import tpu as pltpu


def _round_up(x, m):
    return ((x + m - 1) // m) * m


def _erf(x):
    # Abramowitz & Stegun 7.1.26 (|err| <= 1.5e-7): exact-GELU semantics without relying on
    # a lax.erf lowering in Mosaic; only abs/mul/add/where (VPU) and exp (EUP slot).
    a1, a2, a3, a4, a5 = 0.254829592, -0.284496736, 1.421413741, -1.453152027, 1.061405429
    p = 0.3275911
    s = jnp.where(x >= 0, 1.0, -1.0).astype(x.dtype)
    xa = jnp.abs(x)
    t = 1.0 / (1.0 + p * xa)
    poly = ((((a5 * t + a4) * t + a3) * t + a2) * t + a1) * t
    return s * (1.0 - poly * jnp.exp(-xa * xa))


def _gelu_exact(x):
    # torch.nn.GELU() default (erf form): 0.5 * x * (1 + erf(x / sqrt(2)))
    return 0.5 * x * (1.0 + _erf(x * 0.7071067811865476))


def fused_tail_kernel(x_ref, w1_ref, b1_ref, w2_ref, b2_ref, o_ref):
    # x:  [tb, C*L]  lane-dense flattened backbone features (avg-pool folded into w1)
    # w1: [C*L, 256] pool-folded first-layer weights, (valence | arousal) concatenated
    # b1: [1, 256]   f32
    # w2: [256, 128] f32 block-diagonal second layers, zero-padded to 128 output lanes
    # b2: [1, 128]   f32
    # o:  [tb, 128]  f32; cols 0:2 = valence, 2:4 = arousal, remaining lanes are padding
    h = jnp.dot(x_ref[...], w1_ref[...], preferred_element_type=jnp.float32) + b1_ref[...]
    h = _gelu_exact(h)
    # Dropout(0.4) / Dropout(0.3): identity in eval mode.
    out = jnp.dot(h, w2_ref[...], preferred_element_type=jnp.float32) + b2_ref[...]
    o_ref[...] = out.astype(o_ref.dtype)


def fuse_head_params(w1_v, b1_v, w2_v, b2_v, w1_a, b1_a, w2_a, b2_a, *, seq_len,
                     out_pad=128, w1_dtype=jnp.float32):
    """w1_*: [D, H] (pre-transposed from torch [H, D]); w2_*: [H, O]; biases 1-D.

    Returns (w1_big, b1_all, w2_all, b2_all) with the global average pool over `seq_len`
    folded into w1_big ([D*seq_len, 2H]).  w1_big is stored in `w1_dtype` (use bf16 to halve
    the dominant HBM traffic); biases and the tiny second layer stay f32.
    """
    D, H = w1_v.shape
    O = w2_v.shape[1]
    w1_all = jnp.concatenate([w1_v, w1_a], axis=1)                        # [D, 2H]
    # Row c*L + l of w1_big equals w1_all[c] / L, matching feats.reshape(B, C*L) ordering.
    w1_big = (jnp.repeat(w1_all, seq_len, axis=0) * (1.0 / seq_len)).astype(w1_dtype)
    b1_all = jnp.concatenate([b1_v, b1_a]).reshape(1, 2 * H).astype(jnp.float32)
    w2_all = jnp.zeros((2 * H, out_pad), jnp.float32)                     # block-diagonal
    w2_all = w2_all.at[:H, 0:O].set(w2_v.astype(jnp.float32))
    w2_all = w2_all.at[H:, O:2 * O].set(w2_a.astype(jnp.float32))
    b2_all = jnp.zeros((1, out_pad), jnp.float32)
    b2_all = b2_all.at[0, 0:O].set(b2_v.astype(jnp.float32))
    b2_all = b2_all.at[0, O:2 * O].set(b2_a.astype(jnp.float32))
    return w1_big, b1_all, w2_all, b2_all


def multitask_heads(feats, w1_big, b1_all, w2_all, b2_all, *, batch_tile=128, num_outputs=2):
    """feats: [B, C, L]. Returns {'valence': [B,2], 'arousal': [B,2]} (f32)."""
    B, C, L = feats.shape
    K, H2 = w1_big.shape
    assert K == C * L, "w1_big must be built with seq_len == feats.shape[-1]"
    OP = w2_all.shape[1]

    # Lane-dense view; free since L is the contiguous minor dim.  Cast once to the streaming
    # dtype (TODO(synk): in production, take bf16 directly from the backbone instead).
    x2d = feats.reshape(B, K).astype(w1_big.dtype)

    # Batch tiling: tile respects the sublane rule; batch padded to a tile multiple so every
    # B takes the pipelined grid path (no whole-array-in-VMEM fallback).
    tile = _round_up(min(batch_tile, _round_up(B, 8)), 8)
    Bp = _round_up(B, tile)
    if Bp != B:
        x2d = jnp.pad(x2d, ((0, Bp - B), (0, 0)))
    grid = (Bp // tile,)

    # VMEM budget: double-buffered feats tile + weights (+ headroom), clamped for v5e/v7x.
    itemsize = jnp.dtype(x2d.dtype).itemsize
    blk_bytes = (tile * K * itemsize
                 + K * H2 * jnp.dtype(w1_big.dtype).itemsize
                 + tile * OP * 4
                 + H2 * OP * 4 + H2 * 4 + OP * 4)
    vmem_limit = int(min(max(2 * blk_bytes + (4 << 20), 16 << 20), 40 << 20))

    slab = pl.pallas_call(
        fused_tail_kernel,
        out_shape=jax.ShapeDtypeStruct((Bp, OP), jnp.float32),
        grid=grid,
        in_specs=[
            pl.BlockSpec((tile, K), lambda i: (i, 0)),   # feats tile (streams over batch)
            pl.BlockSpec((K, H2), lambda i: (0, 0)),     # W1big (block-resident)
            pl.BlockSpec((1, H2), lambda i: (0, 0)),
            pl.BlockSpec((H2, OP), lambda i: (0, 0)),
            pl.BlockSpec((1, OP), lambda i: (0, 0)),
        ],
        out_specs=pl.BlockSpec((tile, OP), lambda i: (i, 0)),
        compiler_params=pltpu.CompilerParams(
            dimension_semantics=("parallel",),
            vmem_limit_bytes=vmem_limit,
        ),
    )(x2d, w1_big, b1_all, w2_all, b2_all)

    o = num_outputs
    return {"valence": slab[:B, 0:o], "arousal": slab[:B, o:2 * o]}


def reference(feats, w1_v, b1_v, w2_v, b2_v, w1_a, b1_a, w2_a, b2_a):
    hi = jax.lax.Precision.HIGHEST
    x = jnp.mean(feats, axis=-1)
    hv = jax.nn.gelu(jnp.dot(x, w1_v, precision=hi) + b1_v, approximate=False)
    ha = jax.nn.gelu(jnp.dot(x, w1_a, precision=hi) + b1_a, approximate=False)
    return {"valence": jnp.dot(hv, w2_v, precision=hi) + b2_v,
            "arousal": jnp.dot(ha, w2_a, precision=hi) + b2_a}


if __name__ == "__main__":
    key = jax.random.PRNGKey(0)
    C, L = 240, 16           # C = 240 backbone channels feeding the heads; L = feature length
    H, O = 128, 2

    keys = jax.random.split(key, 10)
    # PyTorch head weights are [128, 240] / [2, 128]; stored pre-transposed [in, out].
    w1_v = jax.random.normal(keys[1], (C, H), dtype=jnp.float32) * 0.05
    b1_v = jax.random.normal(keys[2], (H,), dtype=jnp.float32) * 0.01
    w2_v = jax.random.normal(keys[3], (H, O), dtype=jnp.float32) * 0.05
    b2_v = jax.random.normal(keys[4], (O,), dtype=jnp.float32) * 0.01
    w1_a = jax.random.normal(keys[5], (C, H), dtype=jnp.float32) * 0.05
    b1_a = jax.random.normal(keys[6], (H,), dtype=jnp.float32) * 0.01
    w2_a = jax.random.normal(keys[7], (H, O), dtype=jnp.float32) * 0.05
    b2_a = jax.random.normal(keys[8], (O,), dtype=jnp.float32) * 0.01

    # --- f32 path, small batch (single tile, grid=(1,)) ---
    B = 8
    feats = jax.random.normal(keys[0], (B, C, L), dtype=jnp.float32)
    fused_f32 = fuse_head_params(w1_v, b1_v, w2_v, b2_v, w1_a, b1_a, w2_a, b2_a,
                                 seq_len=L, w1_dtype=jnp.float32)
    out = multitask_heads(feats, *fused_f32)
    out = jax.block_until_ready(out)
    ref = reference(feats, w1_v, b1_v, w2_v, b2_v, w1_a, b1_a, w2_a, b2_a)
    assert out["valence"].shape == (B, O) and out["arousal"].shape == (B, O)
    assert jnp.allclose(out["valence"], ref["valence"], atol=2e-3, rtol=1e-3), "valence mismatch (f32)"
    assert jnp.allclose(out["arousal"], ref["arousal"], atol=2e-3, rtol=1e-3), "arousal mismatch (f32)"

    # --- bf16 streaming path, batch NOT divisible by the tile (pads 300 -> 384, grid=(3,)) ---
    B2 = 300
    feats2 = jax.random.normal(keys[9], (B2, C, L), dtype=jnp.float32)
    fused_bf16 = fuse_head_params(w1_v, b1_v, w2_v, b2_v, w1_a, b1_a, w2_a, b2_a,
                                  seq_len=L, w1_dtype=jnp.bfloat16)
    out2 = multitask_heads(feats2, *fused_bf16, batch_tile=128)
    out2 = jax.block_until_ready(out2)
    ref2 = reference(feats2, w1_v, b1_v, w2_v, b2_v, w1_a, b1_a, w2_a, b2_a)
    assert out2["valence"].shape == (B2, O) and out2["arousal"].shape == (B2, O)
    assert jnp.allclose(out2["valence"], ref2["valence"], atol=2e-2, rtol=5e-2), "valence mismatch (bf16 tiled)"
    assert jnp.allclose(out2["arousal"], ref2["arousal"], atol=2e-2, rtol=5e-2), "arousal mismatch (bf16 tiled)"

    print("KERNEL_OK")
</pallas_src>

<mosaic_0001>
module attributes {stable_mosaic.version = 11 : i64} {
  func.func @fused_tail_kernel(%arg0: i32, %arg1: memref<8x3840xf32, #tpu.memory_space<vmem>>, %arg2: memref<3840x256xf32, #tpu.memory_space<vmem>>, %arg3: memref<1x256xf32, #tpu.memory_space<vmem>>, %arg4: memref<256x128xf32, #tpu.memory_space<vmem>>, %arg5: memref<1x128xf32, #tpu.memory_space<vmem>>, %arg6: memref<8x128xf32, #tpu.memory_space<vmem>>) attributes {dimension_semantics = [#tpu.dimension_semantics<parallel>], iteration_bounds = array<i64: 1>, scalar_prefetch = 0 : i64, scratch_operands = 0 : i64, tpu.core_type = #tpu.core_type<tc>, window_params = [{transform_indices = @transform_0, window_bounds = array<i64: 8, 3840>}, {pipeline_mode = #tpu.pipeline_mode<synchronous>, transform_indices = @transform_1, window_bounds = array<i64: 3840, 256>}, {pipeline_mode = #tpu.pipeline_mode<synchronous>, transform_indices = @transform_2, window_bounds = array<i64: 1, 256>}, {pipeline_mode = #tpu.pipeline_mode<synchronous>, transform_indices = @transform_3, window_bounds = array<i64: 256, 128>}, {pipeline_mode = #tpu.pipeline_mode<synchronous>, transform_indices = @transform_4, window_bounds = array<i64: 1, 128>}, {transform_indices = @transform_5, window_bounds = array<i64: 8, 128>}]} {
    %c0 = arith.constant 0 : index
    %c0_0 = arith.constant 0 : index
    %0 = vector.load %arg1[%c0, %c0_0] : memref<8x3840xf32, #tpu.memory_space<vmem>>, vector<8x3840xf32>
    %c0_1 = arith.constant 0 : index
    %c0_2 = arith.constant 0 : index
    %1 = vector.load %arg2[%c0_1, %c0_2] : memref<3840x256xf32, #tpu.memory_space<vmem>>, vector<3840x256xf32>
    %cst = arith.constant dense<0.000000e+00> : vector<8x256xf32>
    %2 = tpu.matmul %0, %1, %cst {dimension_numbers = #tpu.dot_dimension_numbers<[1], [0], [0], [1], [0, 0, 1, 1], [], []>} : vector<8x3840xf32>, vector<3840x256xf32>, vector<8x256xf32> -> vector<8x256xf32>
    %c0_3 = arith.constant 0 : index
    %c0_4 = arith.constant 0 : index
    %3 = vector.load %arg3[%c0_3, %c0_4] : memref<1x256xf32, #tpu.memory_space<vmem>>, vector<1x256xf32>
    %4 = vector.broadcast %3 : vector<1x256xf32> to vector<8x256xf32>
    %5 = arith.addf %2, %4 : vector<8x256xf32>
    %cst_5 = arith.constant 5.000000e-01 : f32
    %6 = vector.broadcast %cst_5 : f32 to vector<8x256xf32>
    %7 = arith.mulf %6, %5 : vector<8x256xf32>
    %cst_6 = arith.constant 0.707106769 : f32
    %8 = vector.broadcast %cst_6 : f32 to vector<8x256xf32>
    %9 = arith.mulf %5, %8 : vector<8x256xf32>
    %cst_7 = arith.constant 0.000000e+00 : f32
    %10 = vector.broadcast %cst_7 : f32 to vector<8x256xf32>
    %11 = arith.cmpf oge, %9, %10 : vector<8x256xf32>
    %cst_8 = arith.constant 1.000000e+00 : f32
    %cst_9 = arith.constant -1.000000e+00 : f32
    %12 = vector.broadcast %cst_8 : f32 to vector<8x256xf32>
    %13 = vector.broadcast %cst_9 : f32 to vector<8x256xf32>
    %14 = arith.select %11, %12, %13 : vector<8x256xi1>, vector<8x256xf32>
    %15 = math.absf %9 : vector<8x256xf32>
    %cst_10 = arith.constant 0.327591091 : f32
    %16 = vector.broadcast %cst_10 : f32 to vector<8x256xf32>
    %17 = arith.mulf %16, %15 : vector<8x256xf32>
    %cst_11 = arith.constant 1.000000e+00 : f32
    %18 = vector.broadcast %cst_11 : f32 to vector<8x256xf32>
    %19 = arith.addf %18, %17 : vector<8x256xf32>
    %cst_12 = arith.constant 1.000000e+00 : f32
    %20 = vector.broadcast %cst_12 : f32 to vector<8x256xf32>
    %21 = arith.divf %20, %19 : vector<8x256xf32>
    %cst_13 = arith.constant 1.06140542 : f32
    %22 = vector.broadcast %cst_13 : f32 to vector<8x256xf32>
    %23 = arith.mulf %22, %21 : vector<8x256xf32>
    %cst_14 = arith.constant -1.45315206 : f32
    %24 = vector.broadcast %cst_14 : f32 to vector<8x256xf32>
    %25 = arith.addf %23, %24 : vector<8x256xf32>
    %26 = arith.mulf %25, %21 : vector<8x256xf32>
    %cst_15 = arith.constant 1.42141378 : f32
    %27 = vector.broadcast %cst_15 : f32 to vector<8x256xf32>
    %28 = arith.addf %26, %27 : vector<8x256xf32>
    %29 = arith.mulf %28, %21 : vector<8x256xf32>
    %cst_16 = arith.constant -0.284496725 : f32
    %30 = vector.broadcast %cst_16 : f32 to vector<8x256xf32>
    %31 = arith.addf %29, %30 : vector<8x256xf32>
    %32 = arith.mulf %31, %21 : vector<8x256xf32>
    %cst_17 = arith.constant 0.254829586 : f32
    %33 = vector.broadcast %cst_17 : f32 to vector<8x256xf32>
    %34 = arith.addf %32, %33 : vector<8x256xf32>
    %35 = arith.mulf %34, %21 : vector<8x256xf32>
    %cst_18 = arith.constant 0.000000e+00 : f32
    %36 = vector.broadcast %cst_18 : f32 to vector<8x256xf32>
    %37 = arith.subf %36, %15 : vector<8x256xf32>
    %38 = arith.mulf %37, %15 : vector<8x256xf32>
    %39 = math.exp %38 : vector<8x256xf32>
    %40 = arith.mulf %35, %39 : vector<8x256xf32>
    %cst_19 = arith.constant 1.000000e+00 : f32
    %41 = vector.broadcast %cst_19 : f32 to vector<8x256xf32>
    %42 = arith.subf %41, %40 : vector<8x256xf32>
    %43 = arith.mulf %14, %42 : vector<8x256xf32>
    %cst_20 = arith.constant 1.000000e+00 : f32
    %44 = vector.broadcast %cst_20 : f32 to vector<8x256xf32>
    %45 = arith.addf %44, %43 : vector<8x256xf32>
    %46 = arith.mulf %7, %45 : vector<8x256xf32>
    %c0_21 = arith.constant 0 : index
    %c0_22 = arith.constant 0 : index
    %47 = vector.load %arg4[%c0_21, %c0_22] : memref<256x128xf32, #tpu.memory_space<vmem>>, vector<256x128xf32>
    %cst_23 = arith.constant dense<0.000000e+00> : vector<8x128xf32>
    %48 = tpu.matmul %46, %47, %cst_23 {dimension_numbers = #tpu.dot_dimension_numbers<[1], [0], [0], [1], [0, 0, 1, 1], [], []>} : vector<8x256xf32>, vector<256x128xf32>, vector<8x128xf32> -> vector<8x128xf32>
    %c0_24 = arith.constant 0 : index
    %c0_25 = arith.constant 0 : index
    %49 = vector.load %arg5[%c0_24, %c0_25] : memref<1x128xf32, #tpu.memory_space<vmem>>, vector<1x128xf32>
    %50 = vector.broadcast %49 : vector<1x128xf32> to vector<8x128xf32>
    %51 = arith.addf %48, %50 : vector<8x128xf32>
    %c0_26 = arith.constant 0 : index
    %c0_27 = arith.constant 0 : index
    %52 = vector.load %arg6[%c0_26, %c0_27] : memref<8x128xf32, #tpu.memory_space<vmem>>, vector<8x128xf32>
    tpu.vector_store %arg6[%c0_26, %c0_27], %51 {strides = array<i32>} : memref<8x128xf32, #tpu.memory_space<vmem>>, vector<8x128xf32>,
    return
  }
  func.func @transform_0(%arg0: i32) -> (i32, i32) {
    %c0_i32 = arith.constant 0 : i32
    %c0_i32_0 = arith.constant 0 : i32
    return %arg0, %c0_i32 : i32, i32
  }
  func.func @transform_1(%arg0: i32) -> (i32, i32) {
    %c0_i32 = arith.constant 0 : i32
    %c0_i32_0 = arith.constant 0 : i32
    %c0_i32_1 = arith.constant 0 : i32
    return %c0_i32, %c0_i32_0 : i32, i32
  }
  func.func @transform_2(%arg0: i32) -> (i32, i32) {
    %c0_i32 = arith.constant 0 : i32
    %c0_i32_0 = arith.constant 0 : i32
    %c0_i32_1 = arith.constant 0 : i32
    return %c0_i32, %c0_i32_0 : i32, i32
  }
  func.func @transform_3(%arg0: i32) -> (i32, i32) {
    %c0_i32 = arith.constant 0 : i32
    %c0_i32_0 = arith.constant 0 : i32
    %c0_i32_1 = arith.constant 0 : i32
    return %c0_i32, %c0_i32_0 : i32, i32
  }
  func.func @transform_4(%arg0: i32) -> (i32, i32) {
    %c0_i32 = arith.constant 0 : i32
    %c0_i32_0 = arith.constant 0 : i32
    %c0_i32_1 = arith.constant 0 : i32
    return %c0_i32, %c0_i32_0 : i32, i32
  }
  func.func @transform_5(%arg0: i32) -> (i32, i32) {
    %c0_i32 = arith.constant 0 : i32
    %c0_i32_0 = arith.constant 0 : i32
    return %arg0, %c0_i32 : i32, i32
  }
}

</mosaic_0001>

<llo_original>
// kernel: tpu_custom_call.1
$region0: #{tpu_custom_call.1}
  #allocation0 [shape = 'u32[]', space=smem, size = 0x4, offset = 0x4, fixed_abs, tag = 'smem constant byte address 0x4 - core index']
  #allocation1 [shape = 'u32[144,128]{1,0:T(1,128)}', space=vmem, size = 0x12000, scoped, tag = 'internal scratch']
  %s0 = inlined_call_operand.hbm [shape: f32[8,3840], index: 0, kind: input, shape index: {}]
  %s1 = inlined_call_operand.hbm [shape: f32[3840,256], index: 1, kind: input, shape index: {}]
  %s2 = inlined_call_operand.hbm [shape: f32[1,256], index: 2, kind: input, shape index: {}]
  %s3 = inlined_call_operand.hbm [shape: f32[256,128], index: 3, kind: input, shape index: {}]
  %s4 = inlined_call_operand.hbm [shape: f32[1,128], index: 4, kind: input, shape index: {}]
  %s5 = inlined_call_operand.hbm [shape: f32[8,128], index: 5, kind: output, shape index: {}]
  %s6 = sld [smem:[#allocation0]]
  $region50: #{tpu_custom_call.1} parent=0
    _
  %s8 = ssub.s32 1, %s6
  %s9 = scalar_select 0, %s8, %s6
  $region1: #{tpu_custom_call.1} parent=0
    #allocation2 [shape = 'u8[122880]{0}', space=vmem, size = 0x1e000, scoped, tag = 'input window, operand 0, single buffered']
    #allocation3 [shape = 's32[1]{0}', space=sflag, size = 0x4, scoped, tag = 'scoped memory for tpu_custom_call.1']
    #allocation4 [shape = 's32[1]{0}', space=sflag, size = 0x4, scoped, tag = 'scoped memory for tpu_custom_call.1']
    #allocation5 [shape = 'u8[3932160]{0}', space=vmem, size = 0x3c0000, scoped, tag = 'input window, operand 1, single buffered']
    #allocation6 [shape = 's32[1]{0}', space=sflag, size = 0x4, scoped, tag = 'scoped memory for tpu_custom_call.1']
    #allocation7 [shape = 'u8[1024]{0}', space=vmem, size = 0x400, scoped, tag = 'input window, operand 2, single buffered']
    #allocation8 [shape = 'u8[131072]{0}', space=vmem, size = 0x20000, scoped, tag = 'input window, operand 3, single buffered']
    #allocation9 [shape = 's32[1]{0}', space=sflag, size = 0x4, scoped, tag = 'scoped memory for tpu_custom_call.1']
    #allocation10 [shape = 'u8[512]{0}', space=vmem, size = 0x400, scoped, tag = 'input window, operand 4, single buffered']
    #allocation11 [shape = 'u8[4096]{0}', space=vmem, size = 0x1000, scoped, tag = 'output window, operand 0, single buffered']
    %10 = vsyncpa [#allocation3], 0
    %11 = vsyncpa [#allocation6], 0
    %12 = vsyncpa [#allocation9], 0
    %13 = vsyncpa [#allocation4], 0
    // Predicated region
    $region2: #{tpu_custom_call.1} parent=1 // pred_check
      _
    $region3: #{tpu_custom_call.1} parent=1 // pred_check_branch
      %15 = sbr.rel (0) target = $region5
    $region4: #{tpu_custom_call.1} parent=1 // pred_region
      %s17 = ssub.s32 3840, 3840
      %18 = vsyncadd [#allocation3], %s17
      %s20 = sshll.u32 [#allocation2], 4
      %s21 = int_to_ptr.vmem [resolvable:$true] %s20
      %23 = dma.hbm_to_vmem [thread:$0]  %s0, 3840, %s21, [#allocation3]
    $region5: #{tpu_custom_call.1} parent=1 // pred_fallthru
      _
    // Predicated region
    $region6: #{tpu_custom_call.1} parent=1 // pred_check
      _
    $region7: #{tpu_custom_call.1} parent=1 // pred_check_branch
      %25 = sbr.rel (0) target = $region9
    $region8: #{tpu_custom_call.1} parent=1 // pred_region
      %s27 = ssub.s32 122880, 122880
      %28 = vsyncadd [#allocation6], %s27
      %s29 = sshll.u32 [#allocation5], 4
      %s30 = int_to_ptr.vmem [resolvable:$true] %s29
      %35 = dma.hbm_to_vmem [thread:$0]  %s1, 122880, %s30, [#allocation6], 256, 256, 16
    $region9: #{tpu_custom_call.1} parent=1 // pred_fallthru
      _
    // Predicated region
    $region10: #{tpu_custom_call.1} parent=1 // pred_check
      _
    $region11: #{tpu_custom_call.1} parent=1 // pred_check_branch
      %37 = sbr.rel (0) target = $region13
    $region12: #{tpu_custom_call.1} parent=1 // pred_region
      %s39 = ssub.s32 32, 32
      %40 = vsyncadd [#allocation6], %s39
      %s42 = sshll.u32 [#allocation7], 4
      %s43 = int_to_ptr.vmem [resolvable:$true] %s42
      %45 = dma.hbm_to_vmem [thread:$0]  %s2, 32, %s43, [#allocation6]
    $region13: #{tpu_custom_call.1} parent=1 // pred_fallthru
      _
    // Predicated region
    $region14: #{tpu_custom_call.1} parent=1 // pred_check
      _
    $region15: #{tpu_custom_call.1} parent=1 // pred_check_branch
      %47 = sbr.rel (0) target = $region17
    $region16: #{tpu_custom_call.1} parent=1 // pred_region
      %s49 = ssub.s32 4096, 4096
      %50 = vsyncadd [#allocation9], %s49
      %s51 = sshll.u32 [#allocation8], 4
      %s52 = int_to_ptr.vmem [resolvable:$true] %s51
      %57 = dma.hbm_to_vmem [thread:$0]  %s3, 4096, %s52, [#allocation9], 128, 128, 8
    $region17: #{tpu_custom_call.1} parent=1 // pred_fallthru
      _
    // Predicated region
    $region18: #{tpu_custom_call.1} parent=1 // pred_check
      _
    $region19: #{tpu_custom_call.1} parent=1 // pred_check_branch
      %59 = sbr.rel (0) target = $region21
    $region20: #{tpu_custom_call.1} parent=1 // pred_region
      %s61 = ssub.s32 16, 16
      %62 = vsyncadd [#allocation9], %s61
      %s64 = sshll.u32 [#allocation10], 4
      %s65 = int_to_ptr.vmem [resolvable:$true] %s64
      %67 = dma.hbm_to_vmem [thread:$0]  %s4, 16, %s65, [#allocation9]
    $region21: #{tpu_custom_call.1} parent=1 // pred_fallthru
      _
    // Predicated region
    $region22: #{tpu_custom_call.1} parent=1 // pred_check
      _
    $region23: #{tpu_custom_call.1} parent=1 // pred_check_branch
      %69 = sbr.rel (0) target = $region25
    $region24: #{tpu_custom_call.1} parent=1 // pred_region
      %70 = dma.done [#allocation3], 3840
    $region25: #{tpu_custom_call.1} parent=1 // pred_fallthru
      _
    // Predicated region
    $region26: #{tpu_custom_call.1} parent=1 // pred_check
      _
    $region27: #{tpu_custom_call.1} parent=1 // pred_check_branch
      %72 = sbr.rel (0) target = $region29
    $region28: #{tpu_custom_call.1} parent=1 // pred_region
      %73 = dma.done [#allocation6], 122880
    $region29: #{tpu_custom_call.1} parent=1 // pred_fallthru
      _
    // Predicated region
    $region30: #{tpu_custom_call.1} parent=1 // pred_check
      _
    $region31: #{tpu_custom_call.1} parent=1 // pred_check_branch
      %75 = sbr.rel (0) target = $region33
    $region32: #{tpu_custom_call.1} parent=1 // pred_region
      %76 = dma.done [#allocation6], 32
    $region33: #{tpu_custom_call.1} parent=1 // pred_fallthru
      _
    // Predicated region
    $region34: #{tpu_custom_call.1} parent=1 // pred_check
      _
    $region35: #{tpu_custom_call.1} parent=1 // pred_check_branch
      %78 = sbr.rel (0) target = $region37
    $region36: #{tpu_custom_call.1} parent=1 // pred_region
      %79 = dma.done [#allocation9], 4096
    $region37: #{tpu_custom_call.1} parent=1 // pred_fallthru
      _
    // Predicated region
    $region38: #{tpu_custom_call.1} parent=1 // pred_check
      _
    $region39: #{tpu_custom_call.1} parent=1 // pred_check_branch
      %81 = sbr.rel (0) target = $region41
    $region40: #{tpu_custom_call.1} parent=1 // pred_region
      %82 = dma.done [#allocation9], 16
    $region41: #{tpu_custom_call.1} parent=1 // pred_fallthru
      _
    %v83 = vld [vmem:[#allocation2] sm:$0xff]
    %v84 = vld [vmem:[#allocation2 + $0x8] sm:$0xff]
    %v85 = vld [vmem:[#allocation2 + $0x10] sm:$0xff]
    %v86 = vld [vmem:[#allocation2 + $0x18] sm:$0xff]
    %v87 = vld [vmem:[#allocation2 + $0x20] sm:$0xff]
    %v88 = vld [vmem:[#allocation2 + $0x28] sm:$0xff]
    %v89 = vld [vmem:[#allocation2 + $0x30] sm:$0xff]
    %v90 = vld [vmem:[#allocation2 + $0x38] sm:$0xff]
    %v91 = vld [vmem:[#allocation2 + $0x40] sm:$0xff]
    %v92 = vld [vmem:[#allocation2 + $0x48] sm:$0xff]
    %v93 = vld [vmem:[#allocation2 + $0x50] sm:$0xff]
    %v94 = vld [vmem:[#allocation2 + $0x58] sm:$0xff]
    %v95 = vld [vmem:[#allocation2 + $0x60] sm:$0xff]
    %v96 = vld [vmem:[#allocation2 + $0x68] sm:$0xff]
    %v97 = vld [vmem:[#allocation2 + $0x70] sm:$0xff]
    %v98 = vld [vmem:[#allocation2 + $0x78] sm:$0xff]
    %v99 = vld [vmem:[#allocation2 + $0x80] sm:$0xff]
    %v100 = vld [vmem:[#allocation2 + $0x88] sm:$0xff]
    %v101 = vld [vmem:[#allocation2 + $0x90] sm:$0xff]
    %v102 = vld [vmem:[#allocation2 + $0x98] sm:$0xff]
    %v103 = vld [vmem:[#allocation2 + $0xa0] sm:$0xff]
    %v104 = vld [vmem:[#allocation2 + $0xa8] sm:$0xff]
    %v105 = vld [vmem:[#allocation2 + $0xb0] sm:$0xff]
    %v106 = vld [vmem:[#allocation2 + $0xb8] sm:$0xff]
    %v107 = vld [vmem:[#allocation2 + $0xc0] sm:$0xff]
    %v108 = vld [vmem:[#allocation2 + $0xc8] sm:$0xff]
    %v109 = vld [vmem:[#allocation2 + $0xd0] sm:$0xff]
    %v110 = vld [vmem:[#allocation2 + $0xd8] sm:$0xff]
    %v111 = vld [vmem:[#allocation2 + $0xe0] sm:$0xff]
    %v112 = vld [vmem:[#allocation2 + $0xe8] sm:$0xff]
    %v113 = vld [vmem:[#allocation5] sm:$0xff]
    %v114 = vld [vmem:[#allocation5 + $0x8] sm:$0xff]
    %v115 = vld [vmem:[#allocation5 + $0x10] sm:$0xff]
    %v116 = vld [vmem:[#allocation5 + $0x18] sm:$0xff]
    %v117 = vld [vmem:[#allocation5 + $0x20] sm:$0xff]
    %v118 = vld [vmem:[#allocation5 + $0x28] sm:$0xff]
    %v119 = vld [vmem:[#allocation5 + $0x30] sm:$0xff]
    %v120 = vld [vmem:[#allocation5 + $0x38] sm:$0xff]
    %v121 = vld [vmem:[#allocation5 + $0x40] sm:$0xff]
    %v122 = vld [vmem:[#allocation5 + $0x48] sm:$0xff]
    %v123 = vld [vmem:[#allocation5 + $0x50] sm:$0xff]
    %v124 = vld [vmem:[#allocation5 + $0x58] sm:$0xff]
    %v125 = vld [vmem:[#allocation5 + $0x60] sm:$0xff]
    %v126 = vld [vmem:[#allocation5 + $0x68] sm:$0xff]
    %v127 = vld [vmem:[#allocation5 + $0x70] sm:$0xff]
    %v128 = vld [vmem:[#allocation5 + $0x78] sm:$0xff]
    %v129 = vld [vmem:[#allocation5 + $0x80] sm:$0xff]
    %v130 = vld [vmem:[#allocation5 + $0x88] sm:$0xff]
    %v131 = vld [vmem:[#allocation5 + $0x90] sm:$0xff]
    %v132 = vld [vmem:[#allocation5 + $0x98] sm:$0xff]
    %v133 = vld [vmem:[#allocation5 + $0xa0] sm:$0xff]
    %v134 = vld [vmem:[#allocation5 + $0xa8] sm:$0xff]
    %v135 = vld [vmem:[#allocation5 + $0xb0] sm:$0xff]
    %v136 = vld [vmem:[#allocation5 + $0xb8] sm:$0xff]
    %v137 = vld [vmem:[#allocation5 + $0xc0] sm:$0xff]
    %v138 = vld [vmem:[#allocation5 + $0xc8] sm:$0xff]
    %v139 = vld [vmem:[#allocation5 + $0xd0] sm:$0xff]
    %v140 = vld [vmem:[#allocation5 + $0xd8] sm:$0xff]
    %v141 = vld [vmem:[#allocation5 + $0xe0] sm:$0xff]
    %v142 = vld [vmem:[#allocation5 + $0xe8] sm:$0xff]
    %v143 = vld [vmem:[#allocation5 + $0xf0] sm:$0xff]
    %v144 = vld [vmem:[#allocation5 + $0xf8] sm:$0xff]
    %v145 = vld [vmem:[#allocation5 + $0x100] sm:$0xff]
    %v146 = vld [vmem:[#allocation5 + $0x108] sm:$0xff]
    %v147 = vld [vmem:[#allocation5 + $0x110] sm:$0xff]
    %v148 = vld [vmem:[#allocation5 + $0x118] sm:$0xff]
    %v149 = vld [vmem:[#allocation5 + $0x120] sm:$0xff]
    %v150 = vld [vmem:[#allocation5 + $0x128] sm:$0xff]
    %v151 = vld [vmem:[#allocation5 + $0x130] sm:$0xff]
    %v152 = vld [vmem:[#allocation5 + $0x138] sm:$0xff]
    %v153 = vld [vmem:[#allocation5 + $0x140] sm:$0xff]
    %v154 = vld [vmem:[#allocation5 + $0x148] sm:$0xff]
    %v155 = vld [vmem:[#allocation5 + $0x150] sm:$0xff]
    %v156 = vld [vmem:[#allocation5 + $0x158] sm:$0xff]
    %v157 = vld [vmem:[#allocation5 + $0x160] sm:$0xff]
    %v158 = vld [vmem:[#allocation5 + $0x168] sm:$0xff]
    %v159 = vld [vmem:[#allocation5 + $0x170] sm:$0xff]
    %v160 = vld [vmem:[#allocation5 + $0x178] sm:$0xff]
    %v161 = vld [vmem:[#allocation5 + $0x180] sm:$0xff]
    %v162 = vld [vmem:[#allocation5 + $0x188] sm:$0xff]
    %v163 = vld [vmem:[#allocation5 + $0x190] sm:$0xff]
    %v164 = vld [vmem:[#allocation5 + $0x198] sm:$0xff]
    %v165 = vld [vmem:[#allocation5 + $0x1a0] sm:$0xff]
    %v166 = vld [vmem:[#allocation5 + $0x1a8] sm:$0xff]
    %v167 = vld [vmem:[#allocation5 + $0x1b0] sm:$0xff]
    %v168 = vld [vmem:[#allocation5 + $0x1b8] sm:$0xff]
    %v169 = vld [vmem:[#allocation5 + $0x1c0] sm:$0xff]
    %v170 = vld [vmem:[#allocation5 + $0x1c8] sm:$0xff]
    %v171 = vld [vmem:[#allocation5 + $0x1d0] sm:$0xff]
    %v172 = vld [vmem:[#allocation5 + $0x1d8] sm:$0xff]
    %v173 = vld [vmem:[#allocation5 + $0x1e0] sm:$0xff]
    %v174 = vld [vmem:[#allocation5 + $0x1e8] sm:$0xff]
    %v175 = vld [vmem:[#allocation5 + $0x1f0] sm:$0xff]
    %v176 = vld [vmem:[#allocation5 + $0x1f8] sm:$0xff]
    %v177 = vld [vmem:[#allocation5 + $0x200] sm:$0xff]
    %v178 = vld [vmem:[#allocation5 + $0x208] sm:$0xff]
    %v179 = vld [vmem:[#allocation5 + $0x210] sm:$0xff]
    %v180 = vld [vmem:[#allocation5 + $0x218] sm:$0xff]
    %v181 = vld [vmem:[#allocation5 + $0x220] sm:$0xff]
    %v182 = vld [vmem:[#allocation5 + $0x228] sm:$0xff]
    %v183 = vld [vmem:[#allocation5 + $0x230] sm:$0xff]
    %v184 = vld [vmem:[#allocation5 + $0x238] sm:$0xff]
    %v185 = vld [vmem:[#allocation5 + $0x240] sm:$0xff]
    %v186 = vld [vmem:[#allocation5 + $0x248] sm:$0xff]
    %v187 = vld [vmem:[#allocation5 + $0x250] sm:$0xff]
    %v188 = vld [vmem:[#allocation5 + $0x258] sm:$0xff]
    %v189 = vld [vmem:[#allocation5 + $0x260] sm:$0xff]
    %v190 = vld [vmem:[#allocation5 + $0x268] sm:$0xff]
    %v191 = vld [vmem:[#allocation5 + $0x270] sm:$0xff]
    %v192 = vld [vmem:[#allocation5 + $0x278] sm:$0xff]
    %v193 = vld [vmem:[#allocation5 + $0x280] sm:$0xff]
    %v194 = vld [vmem:[#allocation5 + $0x288] sm:$0xff]
    %v195 = vld [vmem:[#allocation5 + $0x290] sm:$0xff]
    %v196 = vld [vmem:[#allocation5 + $0x298] sm:$0xff]
    %v197 = vld [vmem:[#allocation5 + $0x2a0] sm:$0xff]
    %v198 = vld [vmem:[#allocation5 + $0x2a8] sm:$0xff]
    %v199 = vld [vmem:[#allocation5 + $0x2b0] sm:$0xff]
    %v200 = vld [vmem:[#allocation5 + $0x2b8] sm:$0xff]
    %v201 = vld [vmem:[#allocation5 + $0x2c0] sm:$0xff]
    %v202 = vld [vmem:[#allocation5 + $0x2c8] sm:$0xff]
    %v203 = vld [vmem:[#allocation5 + $0x2d0] sm:$0xff]
    %v204 = vld [vmem:[#allocation5 + $0x2d8] sm:$0xff]
    %v205 = vld [vmem:[#allocation5 + $0x2e0] sm:$0xff]
    %v206 = vld [vmem:[#allocation5 + $0x2e8] sm:$0xff]
    %v207 = vld [vmem:[#allocation5 + $0x2f0] sm:$0xff]
    %v208 = vld [vmem:[#allocation5 + $0x2f8] sm:$0xff]
    %v209 = vld [vmem:[#allocation5 + $0x300] sm:$0xff]
    %v210 = vld [vmem:[#allocation5 + $0x308] sm:$0xff]
    %v211 = vld [vmem:[#allocation5 + $0x310] sm:$0xff]
    %v212 = vld [vmem:[#allocation5 + $0x318] sm:$0xff]
    %v213 = vld [vmem:[#allocation5 + $0x320] sm:$0xff]
    %v214 = vld [vmem:[#allocation5 + $0x328] sm:$0xff]
    %v215 = vld [vmem:[#allocation5 + $0x330] sm:$0xff]
    %v216 = vld [vmem:[#allocation5 + $0x338] sm:$0xff]
    %v217 = vld [vmem:[#allocation5 + $0x340] sm:$0xff]
    %v218 = vld [vmem:[#allocation5 + $0x348] sm:$0xff]
    %v219 = vld [vmem:[#allocation5 + $0x350] sm:$0xff]
    %v220 = vld [vmem:[#allocation5 + $0x358] sm:$0xff]
    %v221 = vld [vmem:[#allocation5 + $0x360] sm:$0xff]
    %v222 = vld [vmem:[#allocation5 + $0x368] sm:$0xff]
    %v223 = vld [vmem:[#allocation5 + $0x370] sm:$0xff]
    %v224 = vld [vmem:[#allocation5 + $0x378] sm:$0xff]
    %v225 = vld [vmem:[#allocation5 + $0x380] sm:$0xff]
    %v226 = vld [vmem:[#allocation5 + $0x388] sm:$0xff]
    %v227 = vld [vmem:[#allocation5 + $0x390] sm:$0xff]
    %v228 = vld [vmem:[#allocation5 + $0x398] sm:$0xff]
    %v229 = vld [vmem:[#allocation5 + $0x3a0] sm:$0xff]
    %v230 = vld [vmem:[#allocation5 + $0x3a8] sm:$0xff]
    %v231 = vld [vmem:[#allocation5 + $0x3b0] sm:$0xff]
    %v232 = vld [vmem:[#allocation5 + $0x3b8] sm:$0xff]
    %v233 = vld [vmem:[#allocation5 + $0x3c0] sm:$0xff]
    %v234 = vld [vmem:[#allocation5 + $0x3c8] sm:$0xff]
    %v235 = vld [vmem:[#allocation5 + $0x3d0] sm:$0xff]
    %v236 = vld [vmem:[#allocation5 + $0x3d8] sm:$0xff]
    %v237 = vld [vmem:[#allocation5 + $0x3e0] sm:$0xff]
    %v238 = vld [vmem:[#allocation5 + $0x3e8] sm:$0xff]
    %v239 = vld [vmem:[#allocation5 + $0x3f0] sm:$0xff]
    %v240 = vld [vmem:[#allocation5 + $0x3f8] sm:$0xff]
    %v241 = vld [vmem:[#allocation5 + $0x400] sm:$0xff]
    %v242 = vld [vmem:[#allocation5 + $0x408] sm:$0xff]
    %v243 = vld [vmem:[#allocation5 + $0x410] sm:$0xff]
    %v244 = vld [vmem:[#allocation5 + $0x418] sm:$0xff]
    %v245 = vld [vmem:[#allocation5 + $0x420] sm:$0xff]
    %v246 = vld [vmem:[#allocation5 + $0x428] sm:$0xff]
    %v247 = vld [vmem:[#allocation5 + $0x430] sm:$0xff]
    %v248 = vld [vmem:[#allocation5 + $0x438] sm:$0xff]
    %v249 = vld [vmem:[#allocation5 + $0x440] sm:$0xff]
    %v250 = vld [vmem:[#allocation5 + $0x448] sm:$0xff]
    %v251 = vld [vmem:[#allocation5 + $0x450] sm:$0xff]
    %v252 = vld [vmem:[#allocation5 + $0x458] sm:$0xff]
    %v253 = vld [vmem:[#allocation5 + $0x460] sm:$0xff]
    %v254 = vld [vmem:[#allocation5 + $0x468] sm:$0xff]
    %v255 = vld [vmem:[#allocation5 + $0x470] sm:$0xff]
    %v256 = vld [vmem:[#allocation5 + $0x478] sm:$0xff]
    %v257 = vld [vmem:[#allocation5 + $0x480] sm:$0xff]
    %v258 = vld [vmem:[#allocation5 + $0x488] sm:$0xff]
    %v259 = vld [vmem:[#allocation5 + $0x490] sm:$0xff]
    %v260 = vld [vmem:[#allocation5 + $0x498] sm:$0xff]
    %v261 = vld [vmem:[#allocation5 + $0x4a0] sm:$0xff]
    %v262 = vld [vmem:[#allocation5 + $0x4a8] sm:$0xff]
    %v263 = vld [vmem:[#allocation5 + $0x4b0] sm:$0xff]
    %v264 = vld [vmem:[#allocation5 + $0x4b8] sm:$0xff]
    %v265 = vld [vmem:[#allocation5 + $0x4c0] sm:$0xff]
    %v266 = vld [vmem:[#allocation5 + $0x4c8] sm:$0xff]
    %v267 = vld [vmem:[#allocation5 + $0x4d0] sm:$0xff]
    %v268 = vld [vmem:[#allocation5 + $0x4d8] sm:$0xff]
    %v269 = vld [vmem:[#allocation5 + $0x4e0] sm:$0xff]
    %v270 = vld [vmem:[#allocation5 + $0x4e8] sm:$0xff]
    %v271 = vld [vmem:[#allocation5 + $0x4f0] sm:$0xff]
    %v272 = vld [vmem:[#allocation5 + $0x4f8] sm:$0xff]
    %v273 = vld [vmem:[#allocation5 + $0x500] sm:$0xff]
    %v274 = vld [vmem:[#allocation5 + $0x508] sm:$0xff]
    %v275 = vld [vmem:[#allocation5 + $0x510] sm:$0xff]
    %v276 = vld [vmem:[#allocation5 + $0x518] sm:$0xff]
    %v277 = vld [vmem:[#allocation5 + $0x520] sm:$0xff]
    %v278 = vld [vmem:[#allocation5 + $0x528] sm:$0xff]
    %v279 = vld [vmem:[#allocation5 + $0x530] sm:$0xff]
    %v280 = vld [vmem:[#allocation5 + $0x538] sm:$0xff]
    %v281 = vld [vmem:[#allocation5 + $0x540] sm:$0xff]
    %v282 = vld [vmem:[#allocation5 + $0x548] sm:$0xff]
    %v283 = vld [vmem:[#allocation5 + $0x550] sm:$0xff]
    %v284 = vld [vmem:[#allocation5 + $0x558] sm:$0xff]
    %v285 = vld [vmem:[#allocation5 + $0x560] sm:$0xff]
    %v286 = vld [vmem:[#allocation5 + $0x568] sm:$0xff]
    %v287 = vld [vmem:[#allocation5 + $0x570] sm:$0xff]
    %v288 = vld [vmem:[#allocation5 + $0x578] sm:$0xff]
    %v289 = vld [vmem:[#allocation5 + $0x580] sm:$0xff]
    %v290 = vld [vmem:[#allocation5 + $0x588] sm:$0xff]
    %v291 = vld [vmem:[#allocation5 + $0x590] sm:$0xff]
    %v292 = vld [vmem:[#allocation5 + $0x598] sm:$0xff]
    %v293 = vld [vmem:[#allocation5 + $0x5a0] sm:$0xff]
    %v294 = vld [vmem:[#allocation5 + $0x5a8] sm:$0xff]
    %v295 = vld [vmem:[#allocation5 + $0x5b0] sm:$0xff]
    %v296 = vld [vmem:[#allocation5 + $0x5b8] sm:$0xff]
    %v297 = vld [vmem:[#allocation5 + $0x5c0] sm:$0xff]
    %v298 = vld [vmem:[#allocation5 + $0x5c8] sm:$0xff]
    %v299 = vld [vmem:[#allocation5 + $0x5d0] sm:$0xff]
    %v300 = vld [vmem:[#allocation5 + $0x5d8] sm:$0xff]
    %v301 = vld [vmem:[#allocation5 + $0x5e0] sm:$0xff]
    %v302 = vld [vmem:[#allocation5 + $0x5e8] sm:$0xff]
    %v303 = vld [vmem:[#allocation5 + $0x5f0] sm:$0xff]
    %v304 = vld [vmem:[#allocation5 + $0x5f8] sm:$0xff]
    %v305 = vld [vmem:[#allocation5 + $0x600] sm:$0xff]
    %v306 = vld [vmem:[#allocation5 + $0x608] sm:$0xff]
    %v307 = vld [vmem:[#allocation5 + $0x610] sm:$0xff]
    %v308 = vld [vmem:[#allocation5 + $0x618] sm:$0xff]
    %v309 = vld [vmem:[#allocation5 + $0x620] sm:$0xff]
    %v310 = vld [vmem:[#allocation5 + $0x628] sm:$0xff]
    %v311 = vld [vmem:[#allocation5 + $0x630] sm:$0xff]
    %v312 = vld [vmem:[#allocation5 + $0x638] sm:$0xff]
    %v313 = vld [vmem:[#allocation5 + $0x640] sm:$0xff]
    %v314 = vld [vmem:[#allocation5 + $0x648] sm:$0xff]
    %v315 = vld [vmem:[#allocation5 + $0x650] sm:$0xff]
    %v316 = vld [vmem:[#allocation5 + $0x658] sm:$0xff]
    %v317 = vld [vmem:[#allocation5 + $0x660] sm:$0xff]
    %v318 = vld [vmem:[#allocation5 + $0x668] sm:$0xff]
    %v319 = vld [vmem:[#allocation5 + $0x670] sm:$0xff]
    %v320 = vld [vmem:[#allocation5 + $0x678] sm:$0xff]
    %v321 = vld [vmem:[#allocation5 + $0x680] sm:$0xff]
    %v322 = vld [vmem:[#allocation5 + $0x688] sm:$0xff]
    %v323 = vld [vmem:[#allocation5 + $0x690] sm:$0xff]
    %v324 = vld [vmem:[#allocation5 + $0x698] sm:$0xff]
    %v325 = vld [vmem:[#allocation5 + $0x6a0] sm:$0xff]
    %v326 = vld [vmem:[#allocation5 + $0x6a8] sm:$0xff]
    %v327 = vld [vmem:[#allocation5 + $0x6b0] sm:$0xff]
    %v328 = vld [vmem:[#allocation5 + $0x6b8] sm:$0xff]
    %v329 = vld [vmem:[#allocation5 + $0x6c0] sm:$0xff]
    %v330 = vld [vmem:[#allocation5 + $0x6c8] sm:$0xff]
    %v331 = vld [vmem:[#allocation5 + $0x6d0] sm:$0xff]
    %v332 = vld [vmem:[#allocation5 + $0x6d8] sm:$0xff]
    %v333 = vld [vmem:[#allocation5 + $0x6e0] sm:$0xff]
    %v334 = vld [vmem:[#allocation5 + $0x6e8] sm:$0xff]
    %v335 = vld [vmem:[#allocation5 + $0x6f0] sm:$0xff]
    %v336 = vld [vmem:[#allocation5 + $0x6f8] sm:$0xff]
    %v337 = vld [vmem:[#allocation5 + $0x700] sm:$0xff]
    %v338 = vld [vmem:[#allocation5 + $0x708] sm:$0xff]
    %v339 = vld [vmem:[#allocation5 + $0x710] sm:$0xff]
    %v340 = vld [vmem:[#allocation5 + $0x718] sm:$0xff]
    %v341 = vld [vmem:[#allocation5 + $0x720] sm:$0xff]
    %v342 = vld [vmem:[#allocation5 + $0x728] sm:$0xff]
    %v343 = vld [vmem:[#allocation5 + $0x730] sm:$0xff]
    %v344 = vld [vmem:[#allocation5 + $0x738] sm:$0xff]
    %v345 = vld [vmem:[#allocation5 + $0x740] sm:$0xff]
    %v346 = vld [vmem:[#allocation5 + $0x748] sm:$0xff]
    %v347 = vld [vmem:[#allocation5 + $0x750] sm:$0xff]
    %v348 = vld [vmem:[#allocation5 + $0x758] sm:$0xff]
    %v349 = vld [vmem:[#allocation5 + $0x760] sm:$0xff]
    %v350 = vld [vmem:[#allocation5 + $0x768] sm:$0xff]
    %v351 = vld [vmem:[#allocation5 + $0x770] sm:$0xff]
    %v352 = vld [vmem:[#allocation5 + $0x778] sm:$0xff]
    %v353 = vld [vmem:[#allocation5 + $0x780] sm:$0xff]
    %v354 = vld [vmem:[#allocation5 + $0x788] sm:$0xff]
    %v355 = vld [vmem:[#allocation5 + $0x790] sm:$0xff]
    %v356 = vld [vmem:[#allocation5 + $0x798] sm:$0xff]
    %v357 = vld [vmem:[#allocation5 + $0x7a0] sm:$0xff]
    %v358 = vld [vmem:[#allocation5 + $0x7a8] sm:$0xff]
    %v359 = vld [vmem:[#allocation5 + $0x7b0] sm:$0xff]
    %v360 = vld [vmem:[#allocation5 + $0x7b8] sm:$0xff]
    %v361 = vld [vmem:[#allocation5 + $0x7c0] sm:$0xff]
    %v362 = vld [vmem:[#allocation5 + $0x7c8] sm:$0xff]
    %v363 = vld [vmem:[#allocation5 + $0x7d0] sm:$0xff]
    %v364 = vld [vmem:[#allocation5 + $0x7d8] sm:$0xff]
    %v365 = vld [vmem:[#allocation5 + $0x7e0] sm:$0xff]
    %v366 = vld [vmem:[#allocation5 + $0x7e8] sm:$0xff]
    %v367 = vld [vmem:[#allocation5 + $0x7f0] sm:$0xff]
    %v368 = vld [vmem:[#allocation5 + $0x7f8] sm:$0xff]
    %v369 = vld [vmem:[#allocation5 + $0x800] sm:$0xff]
    %v370 = vld [vmem:[#allocation5 + $0x808] sm:$0xff]
    %v371 = vld [vmem:[#allocation5 + $0x810] sm:$0xff]
    %v372 = vld [vmem:[#allocation5 + $0x818] sm:$0xff]
    %v373 = vld [vmem:[#allocation5 + $0x820] sm:$0xff]
    %v374 = vld [vmem:[#allocation5 + $0x828] sm:$0xff]
    %v375 = vld [vmem:[#allocation5 + $0x830] sm:$0xff]
    %v376 = vld [vmem:[#allocation5 + $0x838] sm:$0xff]
    %v377 = vld [vmem:[#allocation5 + $0x840] sm:$0xff]
    %v378 = vld [vmem:[#allocation5 + $0x848] sm:$0xff]
    %v379 = vld [vmem:[#allocation5 + $0x850] sm:$0xff]
    %v380 = vld [vmem:[#allocation5 + $0x858] sm:$0xff]
    %v381 = vld [vmem:[#allocation5 + $0x860] sm:$0xff]
    %v382 = vld [vmem:[#allocation5 + $0x868] sm:$0xff]
    %v383 = vld [vmem:[#allocation5 + $0x870] sm:$0xff]
    %v384 = vld [vmem:[#allocation5 + $0x878] sm:$0xff]
    %v385 = vld [vmem:[#allocation5 + $0x880] sm:$0xff]
    %v386 = vld [vmem:[#allocation5 + $0x888] sm:$0xff]
    %v387 = vld [vmem:[#allocation5 + $0x890] sm:$0xff]
    %v388 = vld [vmem:[#allocation5 + $0x898] sm:$0xff]
    %v389 = vld [vmem:[#allocation5 + $0x8a0] sm:$0xff]
    %v390 = vld [vmem:[#allocation5 + $0x8a8] sm:$0xff]
    %v391 = vld [vmem:[#allocation5 + $0x8b0] sm:$0xff]
    %v392 = vld [vmem:[#allocation5 + $0x8b8] sm:$0xff]
    %v393 = vld [vmem:[#allocation5 + $0x8c0] sm:$0xff]
    %v394 = vld [vmem:[#allocation5 + $0x8c8] sm:$0xff]
    %v395 = vld [vmem:[#allocation5 + $0x8d0] sm:$0xff]
    %v396 = vld [vmem:[#allocation5 + $0x8d8] sm:$0xff]
    %v397 = vld [vmem:[#allocation5 + $0x8e0] sm:$0xff]
    %v398 = vld [vmem:[#allocation5 + $0x8e8] sm:$0xff]
    %v399 = vld [vmem:[#allocation5 + $0x8f0] sm:$0xff]
    %v400 = vld [vmem:[#allocation5 + $0x8f8] sm:$0xff]
    %v401 = vld [vmem:[#allocation5 + $0x900] sm:$0xff]
    %v402 = vld [vmem:[#allocation5 + $0x908] sm:$0xff]
    %v403 = vld [vmem:[#allocation5 + $0x910] sm:$0xff]
    %v404 = vld [vmem:[#allocation5 + $0x918] sm:$0xff]
    %v405 = vld [vmem:[#allocation5 + $0x920] sm:$0xff]
    %v406 = vld [vmem:[#allocation5 + $0x928] sm:$0xff]
    %v407 = vld [vmem:[#allocation5 + $0x930] sm:$0xff]
    %v408 = vld [vmem:[#allocation5 + $0x938] sm:$0xff]
    %v409 = vld [vmem:[#allocation5 + $0x940] sm:$0xff]
    %v410 = vld [vmem:[#allocation5 + $0x948] sm:$0xff]
    %v411 = vld [vmem:[#allocation5 + $0x950] sm:$0xff]
    %v412 = vld [vmem:[#allocation5 + $0x958] sm:$0xff]
    %v413 = vld [vmem:[#allocation5 + $0x960] sm:$0xff]
    %v414 = vld [vmem:[#allocation5 + $0x968] sm:$0xff]
    %v415 = vld [vmem:[#allocation5 + $0x970] sm:$0xff]
    %v416 = vld [vmem:[#allocation5 + $0x978] sm:$0xff]
    %v417 = vld [vmem:[#allocation5 + $0x980] sm:$0xff]
    %v418 = vld [vmem:[#allocation5 + $0x988] sm:$0xff]
    %v419 = vld [vmem:[#allocation5 + $0x990] sm:$0xff]
    %v420 = vld [vmem:[#allocation5 + $0x998] sm:$0xff]
    %v421 = vld [vmem:[#allocation5 + $0x9a0] sm:$0xff]
    %v422 = vld [vmem:[#allocation5 + $0x9a8] sm:$0xff]
    %v423 = vld [vmem:[#allocation5 + $0x9b0] sm:$0xff]
    %v424 = vld [vmem:[#allocation5 + $0x9b8] sm:$0xff]
    %v425 = vld [vmem:[#allocation5 + $0x9c0] sm:$0xff]
    %v426 = vld [vmem:[#allocation5 + $0x9c8] sm:$0xff]
    %v427 = vld [vmem:[#allocation5 + $0x9d0] sm:$0xff]
    %v428 = vld [vmem:[#allocation5 + $0x9d8] sm:$0xff]
    %v429 = vld [vmem:[#allocation5 + $0x9e0] sm:$0xff]
    %v430 = vld [vmem:[#allocation5 + $0x9e8] sm:$0xff]
    %v431 = vld [vmem:[#allocation5 + $0x9f0] sm:$0xff]
    %v432 = vld [vmem:[#allocation5 + $0x9f8] sm:$0xff]
    %v433 = vld [vmem:[#allocation5 + $0xa00] sm:$0xff]
    %v434 = vld [vmem:[#allocation5 + $0xa08] sm:$0xff]
    %v435 = vld [vmem:[#allocation5 + $0xa10] sm:$0xff]
    %v436 = vld [vmem:[#allocation5 + $0xa18] sm:$0xff]
    %v437 = vld [vmem:[#allocation5 + $0xa20] sm:$0xff]
    %v438 = vld [vmem:[#allocation5 + $0xa28] sm:$0xff]
    %v439 = vld [vmem:[#allocation5 + $0xa30] sm:$0xff]
    %v440 = vld [vmem:[#allocation5 + $0xa38] sm:$0xff]
    %v441 = vld [vmem:[#allocation5 + $0xa40] sm:$0xff]
    %v442 = vld [vmem:[#allocation5 + $0xa48] sm:$0xff]
    %v443 = vld [vmem:[#allocation5 + $0xa50] sm:$0xff]
    %v444 = vld [vmem:[#allocation5 + $0xa58] sm:$0xff]
    %v445 = vld [vmem:[#allocation5 + $0xa60] sm:$0xff]
    %v446 = vld [vmem:[#allocation5 + $0xa68] sm:$0xff]
    %v447 = vld [vmem:[#allocation5 + $0xa70] sm:$0xff]
    %v448 = vld [vmem:[#allocation5 + $0xa78] sm:$0xff]
    %v449 = vld [vmem:[#allocation5 + $0xa80] sm:$0xff]
    %v450 = vld [vmem:[#allocation5 + $0xa88] sm:$0xff]
    %v451 = vld [vmem:[#allocation5 + $0xa90] sm:$0xff]
    %v452 = vld [vmem:[#allocation5 + $0xa98] sm:$0xff]
    %v453 = vld [vmem:[#allocation5 + $0xaa0] sm:$0xff]
    %v454 = vld [vmem:[#allocation5 + $0xaa8] sm:$0xff]
    %v455 = vld [vmem:[#allocation5 + $0xab0] sm:$0xff]
    %v456 = vld [vmem:[#allocation5 + $0xab8] sm:$0xff]
    %v457 = vld [vmem:[#allocation5 + $0xac0] sm:$0xff]
    %v458 = vld [vmem:[#allocation5 + $0xac8] sm:$0xff]
    %v459 = vld [vmem:[#allocation5 + $0xad0] sm:$0xff]
    %v460 = vld [vmem:[#allocation5 + $0xad8] sm:$0xff]
    %v461 = vld [vmem:[#allocation5 + $0xae0] sm:$0xff]
    %v462 = vld [vmem:[#allocation5 + $0xae8] sm:$0xff]
    %v463 = vld [vmem:[#allocation5 + $0xaf0] sm:$0xff]
    %v464 = vld [vmem:[#allocation5 + $0xaf8] sm:$0xff]
    %v465 = vld [vmem:[#allocation5 + $0xb00] sm:$0xff]
    %v466 = vld [vmem:[#allocation5 + $0xb08] sm:$0xff]
    %v467 = vld [vmem:[#allocation5 + $0xb10] sm:$0xff]
    %v468 = vld [vmem:[#allocation5 + $0xb18] sm:$0xff]
    %v469 = vld [vmem:[#allocation5 + $0xb20] sm:$0xff]
    %v470 = vld [vmem:[#allocation5 + $0xb28] sm:$0xff]
    %v471 = vld [vmem:[#allocation5 + $0xb30] sm:$0xff]
    %v472 = vld [vmem:[#allocation5 + $0xb38] sm:$0xff]
    %v473 = vld [vmem:[#allocation5 + $0xb40] sm:$0xff]
    %v474 = vld [vmem:[#allocation5 + $0xb48] sm:$0xff]
    %v475 = vld [vmem:[#allocation5 + $0xb50] sm:$0xff]
    %v476 = vld [vmem:[#allocation5 + $0xb58] sm:$0xff]
    %v477 = vld [vmem:[#allocation5 + $0xb60] sm:$0xff]
    %v478 = vld [vmem:[#allocation5 + $0xb68] sm:$0xff]
    %v479 = vld [vmem:[#allocation5 + $0xb70] sm:$0xff]
    %v480 = vld [vmem:[#allocation5 + $0xb78] sm:$0xff]
    %v481 = vld [vmem:[#allocation5 + $0xb80] sm:$0xff]
    %v482 = vld [vmem:[#allocation5 + $0xb88] sm:$0xff]
    %v483 = vld [vmem:[#allocation5 + $0xb90] sm:$0xff]
    %v484 = vld [vmem:[#allocation5 + $0xb98] sm:$0xff]
    %v485 = vld [vmem:[#allocation5 + $0xba0] sm:$0xff]
    %v486 = vld [vmem:[#allocation5 + $0xba8] sm:$0xff]
    %v487 = vld [vmem:[#allocation5 + $0xbb0] sm:$0xff]
    %v488 = vld [vmem:[#allocation5 + $0xbb8] sm:$0xff]
    %v489 = vld [vmem:[#allocation5 + $0xbc0] sm:$0xff]
    %v490 = vld [vmem:[#allocation5 + $0xbc8] sm:$0xff]
    %v491 = vld [vmem:[#allocation5 + $0xbd0] sm:$0xff]
    %v492 = vld [vmem:[#allocation5 + $0xbd8] sm:$0xff]
    %v493 = vld [vmem:[#allocation5 + $0xbe0] sm:$0xff]
    %v494 = vld [vmem:[#allocation5 + $0xbe8] sm:$0xff]
    %v495 = vld [vmem:[#allocation5 + $0xbf0] sm:$0xff]
    %v496 = vld [vmem:[#allocation5 + $0xbf8] sm:$0xff]
    %v497 = vld [vmem:[#allocation5 + $0xc00] sm:$0xff]
    %v498 = vld [vmem:[#allocation5 + $0xc08] sm:$0xff]
    %v499 = vld [vmem:[#allocation5 + $0xc10] sm:$0xff]
    %v500 = vld [vmem:[#allocation5 + $0xc18] sm:$0xff]
    %v501 = vld [vmem:[#allocation5 + $0xc20] sm:$0xff]
    %v502 = vld [vmem:[#allocation5 + $0xc28] sm:$0xff]
    %v503 = vld [vmem:[#allocation5 + $0xc30] sm:$0xff]
    %v504 = vld [vmem:[#allocation5 + $0xc38] sm:$0xff]
    %v505 = vld [vmem:[#allocation5 + $0xc40] sm:$0xff]
    %v506 = vld [vmem:[#allocation5 + $0xc48] sm:$0xff]
    %v507 = vld [vmem:[#allocation5 + $0xc50] sm:$0xff]
    %v508 = vld [vmem:[#allocation5 + $0xc58] sm:$0xff]
    %v509 = vld [vmem:[#allocation5 + $0xc60] sm:$0xff]
    %v510 = vld [vmem:[#allocation5 + $0xc68] sm:$0xff]
    %v511 = vld [vmem:[#allocation5 + $0xc70] sm:$0xff]
    %v512 = vld [vmem:[#allocation5 + $0xc78] sm:$0xff]
    %v513 = vld [vmem:[#allocation5 + $0xc80] sm:$0xff]
    %v514 = vld [vmem:[#allocation5 + $0xc88] sm:$0xff]
    %v515 = vld [vmem:[#allocation5 + $0xc90] sm:$0xff]
    %v516 = vld [vmem:[#allocation5 + $0xc98] sm:$0xff]
    %v517 = vld [vmem:[#allocation5 + $0xca0] sm:$0xff]
    %v518 = vld [vmem:[#allocation5 + $0xca8] sm:$0xff]
    %v519 = vld [vmem:[#allocation5 + $0xcb0] sm:$0xff]
    %v520 = vld [vmem:[#allocation5 + $0xcb8] sm:$0xff]
    %v521 = vld [vmem:[#allocation5 + $0xcc0] sm:$0xff]
    %v522 = vld [vmem:[#allocation5 + $0xcc8] sm:$0xff]
    %v523 = vld [vmem:[#allocation5 + $0xcd0] sm:$0xff]
    %v524 = vld [vmem:[#allocation5 + $0xcd8] sm:$0xff]
    %v525 = vld [vmem:[#allocation5 + $0xce0] sm:$0xff]
    %v526 = vld [vmem:[#allocation5 + $0xce8] sm:$0xff]
    %v527 = vld [vmem:[#allocation5 + $0xcf0] sm:$0xff]
    %v528 = vld [vmem:[#allocation5 + $0xcf8] sm:$0xff]
    %v529 = vld [vmem:[#allocation5 + $0xd00] sm:$0xff]
    %v530 = vld [vmem:[#allocation5 + $0xd08] sm:$0xff]
    %v531 = vld [vmem:[#allocation5 + $0xd10] sm:$0xff]
    %v532 = vld [vmem:[#allocation5 + $0xd18] sm:$0xff]
    %v533 = vld [vmem:[#allocation5 + $0xd20] sm:$0xff]
    %v534 = vld [vmem:[#allocation5 + $0xd28] sm:$0xff]
    %v535 = vld [vmem:[#allocation5 + $0xd30] sm:$0xff]
    %v536 = vld [vmem:[#allocation5 + $0xd38] sm:$0xff]
    %v537 = vld [vmem:[#allocation5 + $0xd40] sm:$0xff]
    %v538 = vld [vmem:[#allocation5 + $0xd48] sm:$0xff]
    %v539 = vld [vmem:[#allocation5 + $0xd50] sm:$0xff]
    %v540 = vld [vmem:[#allocation5 + $0xd58] sm:$0xff]
    %v541 = vld [vmem:[#allocation5 + $0xd60] sm:$0xff]
    %v542 = vld [vmem:[#allocation5 + $0xd68] sm:$0xff]
    %v543 = vld [vmem:[#allocation5 + $0xd70] sm:$0xff]
    %v544 = vld [vmem:[#allocation5 + $0xd78] sm:$0xff]
    %v545 = vld [vmem:[#allocation5 + $0xd80] sm:$0xff]
    %v546 = vld [vmem:[#allocation5 + $0xd88] sm:$0xff]
    %v547 = vld [vmem:[#allocation5 + $0xd90] sm:$0xff]
    %v548 = vld [vmem:[#allocation5 + $0xd98] sm:$0xff]
    %v549 = vld [vmem:[#allocation5 + $0xda0] sm:$0xff]
    %v550 = vld [vmem:[#allocation5 + $0xda8] sm:$0xff]
    %v551 = vld [vmem:[#allocation5 + $0xdb0] sm:$0xff]
    %v552 = vld [vmem:[#allocation5 + $0xdb8] sm:$0xff]
    %v553 = vld [vmem:[#allocation5 + $0xdc0] sm:$0xff]
    %v554 = vld [vmem:[#allocation5 + $0xdc8] sm:$0xff]
    %v555 = vld [vmem:[#allocation5 + $0xdd0] sm:$0xff]
    %v556 = vld [vmem:[#allocation5 + $0xdd8] sm:$0xff]
    %v557 = vld [vmem:[#allocation5 + $0xde0] sm:$0xff]
    %v558 = vld [vmem:[#allocation5 + $0xde8] sm:$0xff]
    %v559 = vld [vmem:[#allocation5 + $0xdf0] sm:$0xff]
    %v560 = vld [vmem:[#allocation5 + $0xdf8] sm:$0xff]
    %v561 = vld [vmem:[#allocation5 + $0xe00] sm:$0xff]
    %v562 = vld [vmem:[#allocation5 + $0xe08] sm:$0xff]
    %v563 = vld [vmem:[#allocation5 + $0xe10] sm:$0xff]
    %v564 = vld [vmem:[#allocation5 + $0xe18] sm:$0xff]
    %v565 = vld [vmem:[#allocation5 + $0xe20] sm:$0xff]
    %v566 = vld [vmem:[#allocation5 + $0xe28] sm:$0xff]
    %v567 = vld [vmem:[#allocation5 + $0xe30] sm:$0xff]
    %v568 = vld [vmem:[#allocation5 + $0xe38] sm:$0xff]
    %v569 = vld [vmem:[#allocation5 + $0xe40] sm:$0xff]
    %v570 = vld [vmem:[#allocation5 + $0xe48] sm:$0xff]
    %v571 = vld [vmem:[#allocation5 + $0xe50] sm:$0xff]
    %v572 = vld [vmem:[#allocation5 + $0xe58] sm:$0xff]
    %v573 = vld [vmem:[#allocation5 + $0xe60] sm:$0xff]
    %v574 = vld [vmem:[#allocation5 + $0xe68] sm:$0xff]
    %v575 = vld [vmem:[#allocation5 + $0xe70] sm:$0xff]
    %v576 = vld [vmem:[#allocation5 + $0xe78] sm:$0xff]
    %v577 = vld [vmem:[#allocation5 + $0xe80] sm:$0xff]
    %v578 = vld [vmem:[#allocation5 + $0xe88] sm:$0xff]
    %v579 = vld [vmem:[#allocation5 + $0xe90] sm:$0xff]
    %v580 = vld [vmem:[#allocation5 + $0xe98] sm:$0xff]
    %v581 = vld [vmem:[#allocation5 + $0xea0] sm:$0xff]
    %v582 = vld [vmem:[#allocation5 + $0xea8] sm:$0xff]
    %v583 = vld [vmem:[#allocation5 + $0xeb0] sm:$0xff]
    %v584 = vld [vmem:[#allocation5 + $0xeb8] sm:$0xff]
    %v585 = vld [vmem:[#allocation5 + $0xec0] sm:$0xff]
    %v586 = vld [vmem:[#allocation5 + $0xec8] sm:$0xff]
    %v587 = vld [vmem:[#allocation5 + $0xed0] sm:$0xff]
    %v588 = vld [vmem:[#allocation5 + $0xed8] sm:$0xff]
    %v589 = vld [vmem:[#allocation5 + $0xee0] sm:$0xff]
    %v590 = vld [vmem:[#allocation5 + $0xee8] sm:$0xff]
    %v591 = vld [vmem:[#allocation5 + $0xef0] sm:$0xff]
    %v592 = vld [vmem:[#allocation5 + $0xef8] sm:$0xff]
    %v593 = vld [vmem:[#allocation5 + $0xf00] sm:$0xff]
    %v594 = vld [vmem:[#allocation5 + $0xf08] sm:$0xff]
    %v595 = vld [vmem:[#allocation5 + $0xf10] sm:$0xff]
    %v596 = vld [vmem:[#allocation5 + $0xf18] sm:$0xff]
    %v597 = vld [vmem:[#allocation5 + $0xf20] sm:$0xff]
    %v598 = vld [vmem:[#allocation5 + $0xf28] sm:$0xff]
    %v599 = vld [vmem:[#allocation5 + $0xf30] sm:$0xff]
    %v600 = vld [vmem:[#allocation5 + $0xf38] sm:$0xff]
    %v601 = vld [vmem:[#allocation5 + $0xf40] sm:$0xff]
    %v602 = vld [vmem:[#allocation5 + $0xf48] sm:$0xff]
    %v603 = vld [vmem:[#allocation5 + $0xf50] sm:$0xff]
    %v604 = vld [vmem:[#allocation5 + $0xf58] sm:$0xff]
    %v605 = vld [vmem:[#allocation5 + $0xf60] sm:$0xff]
    %v606 = vld [vmem:[#allocation5 + $0xf68] sm:$0xff]
    %v607 = vld [vmem:[#allocation5 + $0xf70] sm:$0xff]
    %v608 = vld [vmem:[#allocation5 + $0xf78] sm:$0xff]
    %v609 = vld [vmem:[#allocation5 + $0xf80] sm:$0xff]
    %v610 = vld [vmem:[#allocation5 + $0xf88] sm:$0xff]
    %v611 = vld [vmem:[#allocation5 + $0xf90] sm:$0xff]
    %v612 = vld [vmem:[#allocation5 + $0xf98] sm:$0xff]
    %v613 = vld [vmem:[#allocation5 + $0xfa0] sm:$0xff]
    %v614 = vld [vmem:[#allocation5 + $0xfa8] sm:$0xff]
    %v615 = vld [vmem:[#allocation5 + $0xfb0] sm:$0xff]
    %v616 = vld [vmem:[#allocation5 + $0xfb8] sm:$0xff]
    %v617 = vld [vmem:[#allocation5 + $0xfc0] sm:$0xff]
    %v618 = vld [vmem:[#allocation5 + $0xfc8] sm:$0xff]
    %v619 = vld [vmem:[#allocation5 + $0xfd0] sm:$0xff]
    %v620 = vld [vmem:[#allocation5 + $0xfd8] sm:$0xff]
    %v621 = vld [vmem:[#allocation5 + $0xfe0] sm:$0xff]
    %v622 = vld [vmem:[#allocation5 + $0xfe8] sm:$0xff]
    %v623 = vld [vmem:[#allocation5 + $0xff0] sm:$0xff]
    %v624 = vld [vmem:[#allocation5 + $0xff8] sm:$0xff]
    %v625 = vld [vmem:[#allocation5 + $0x1000] sm:$0xff]
    %v626 = vld [vmem:[#allocation5 + $0x1008] sm:$0xff]
    %v627 = vld [vmem:[#allocation5 + $0x1010] sm:$0xff]
    %v628 = vld [vmem:[#allocation5 + $0x1018] sm:$0xff]
    %v629 = vld [vmem:[#allocation5 + $0x1020] sm:$0xff]
    %v630 = vld [vmem:[#allocation5 + $0x1028] sm:$0xff]
    %v631 = vld [vmem:[#allocation5 + $0x1030] sm:$0xff]
    %v632 = vld [vmem:[#allocation5 + $0x1038] sm:$0xff]
    %v633 = vld [vmem:[#allocation5 + $0x1040] sm:$0xff]
    %v634 = vld [vmem:[#allocation5 + $0x1048] sm:$0xff]
    %v635 = vld [vmem:[#allocation5 + $0x1050] sm:$0xff]
    %v636 = vld [vmem:[#allocation5 + $0x1058] sm:$0xff]
    %v637 = vld [vmem:[#allocation5 + $0x1060] sm:$0xff]
    %v638 = vld [vmem:[#allocation5 + $0x1068] sm:$0xff]
    %v639 = vld [vmem:[#allocation5 + $0x1070] sm:$0xff]
    %v640 = vld [vmem:[#allocation5 + $0x1078] sm:$0xff]
    %v641 = vld [vmem:[#allocation5 + $0x1080] sm:$0xff]
    %v642 = vld [vmem:[#allocation5 + $0x1088] sm:$0xff]
    %v643 = vld [vmem:[#allocation5 + $0x1090] sm:$0xff]
    %v644 = vld [vmem:[#allocation5 + $0x1098] sm:$0xff]
    %v645 = vld [vmem:[#allocation5 + $0x10a0] sm:$0xff]
    %v646 = vld [vmem:[#allocation5 + $0x10a8] sm:$0xff]
    %v647 = vld [vmem:[#allocation5 + $0x10b0] sm:$0xff]
    %v648 = vld [vmem:[#allocation5 + $0x10b8] sm:$0xff]
    %v649 = vld [vmem:[#allocation5 + $0x10c0] sm:$0xff]
    %v650 = vld [vmem:[#allocation5 + $0x10c8] sm:$0xff]
    %v651 = vld [vmem:[#allocation5 + $0x10d0] sm:$0xff]
    %v652 = vld [vmem:[#allocation5 + $0x10d8] sm:$0xff]
    %v653 = vld [vmem:[#allocation5 + $0x10e0] sm:$0xff]
    %v654 = vld [vmem:[#allocation5 + $0x10e8] sm:$0xff]
    %v655 = vld [vmem:[#allocation5 + $0x10f0] sm:$0xff]
    %v656 = vld [vmem:[#allocation5 + $0x10f8] sm:$0xff]
    %v657 = vld [vmem:[#allocation5 + $0x1100] sm:$0xff]
    %v658 = vld [vmem:[#allocation5 + $0x1108] sm:$0xff]
    %v659 = vld [vmem:[#allocation5 + $0x1110] sm:$0xff]
    %v660 = vld [vmem:[#allocation5 + $0x1118] sm:$0xff]
    %v661 = vld [vmem:[#allocation5 + $0x1120] sm:$0xff]
    %v662 = vld [vmem:[#allocation5 + $0x1128] sm:$0xff]
    %v663 = vld [vmem:[#allocation5 + $0x1130] sm:$0xff]
    %v664 = vld [vmem:[#allocation5 + $0x1138] sm:$0xff]
    %v665 = vld [vmem:[#allocation5 + $0x1140] sm:$0xff]
    %v666 = vld [vmem:[#allocation5 + $0x1148] sm:$0xff]
    %v667 = vld [vmem:[#allocation5 + $0x1150] sm:$0xff]
    %v668 = vld [vmem:[#allocation5 + $0x1158] sm:$0xff]
    %v669 = vld [vmem:[#allocation5 + $0x1160] sm:$0xff]
    %v670 = vld [vmem:[#allocation5 + $0x1168] sm:$0xff]
    %v671 = vld [vmem:[#allocation5 + $0x1170] sm:$0xff]
    %v672 = vld [vmem:[#allocation5 + $0x1178] sm:$0xff]
    %v673 = vld [vmem:[#allocation5 + $0x1180] sm:$0xff]
    %v674 = vld [vmem:[#allocation5 + $0x1188] sm:$0xff]
    %v675 = vld [vmem:[#allocation5 + $0x1190] sm:$0xff]
    %v676 = vld [vmem:[#allocation5 + $0x1198] sm:$0xff]
    %v677 = vld [vmem:[#allocation5 + $0x11a0] sm:$0xff]
    %v678 = vld [vmem:[#allocation5 + $0x11a8] sm:$0xff]
    %v679 = vld [vmem:[#allocation5 + $0x11b0] sm:$0xff]
    %v680 = vld [vmem:[#allocation5 + $0x11b8] sm:$0xff]
    %v681 = vld [vmem:[#allocation5 + $0x11c0] sm:$0xff]
    %v682 = vld [vmem:[#allocation5 + $0x11c8] sm:$0xff]
    %v683 = vld [vmem:[#allocation5 + $0x11d0] sm:$0xff]
    %v684 = vld [vmem:[#allocation5 + $0x11d8] sm:$0xff]
    %v685 = vld [vmem:[#allocation5 + $0x11e0] sm:$0xff]
    %v686 = vld [vmem:[#allocation5 + $0x11e8] sm:$0xff]
    %v687 = vld [vmem:[#allocation5 + $0x11f0] sm:$0xff]
    %v688 = vld [vmem:[#allocation5 + $0x11f8] sm:$0xff]
    %v689 = vld [vmem:[#allocation5 + $0x1200] sm:$0xff]
    %v690 = vld [vmem:[#allocation5 + $0x1208] sm:$0xff]
    %v691 = vld [vmem:[#allocation5 + $0x1210] sm:$0xff]
    %v692 = vld [vmem:[#allocation5 + $0x1218] sm:$0xff]
    %v693 = vld [vmem:[#allocation5 + $0x1220] sm:$0xff]
    %v694 = vld [vmem:[#allocation5 + $0x1228] sm:$0xff]
    %v695 = vld [vmem:[#allocation5 + $0x1230] sm:$0xff]
    %v696 = vld [vmem:[#allocation5 + $0x1238] sm:$0xff]
    %v697 = vld [vmem:[#allocation5 + $0x1240] sm:$0xff]
    %v698 = vld [vmem:[#allocation5 + $0x1248] sm:$0xff]
    %v699 = vld [vmem:[#allocation5 + $0x1250] sm:$0xff]
    %v700 = vld [vmem:[#allocation5 + $0x1258] sm:$0xff]
    %v701 = vld [vmem:[#allocation5 + $0x1260] sm:$0xff]
    %v702 = vld [vmem:[#allocation5 + $0x1268] sm:$0xff]
    %v703 = vld [vmem:[#allocation5 + $0x1270] sm:$0xff]
    %v704 = vld [vmem:[#allocation5 + $0x1278] sm:$0xff]
    %v705 = vld [vmem:[#allocation5 + $0x1280] sm:$0xff]
    %v706 = vld [vmem:[#allocation5 + $0x1288] sm:$0xff]
    %v707 = vld [vmem:[#allocation5 + $0x1290] sm:$0xff]
    %v708 = vld [vmem:[#allocation5 + $0x1298] sm:$0xff]
    %v709 = vld [vmem:[#allocation5 + $0x12a0] sm:$0xff]
    %v710 = vld [vmem:[#allocation5 + $0x12a8] sm:$0xff]
    %v711 = vld [vmem:[#allocation5 + $0x12b0] sm:$0xff]
    %v712 = vld [vmem:[#allocation5 + $0x12b8] sm:$0xff]
    %v713 = vld [vmem:[#allocation5 + $0x12c0] sm:$0xff]
    %v714 = vld [vmem:[#allocation5 + $0x12c8] sm:$0xff]
    %v715 = vld [vmem:[#allocation5 + $0x12d0] sm:$0xff]
    %v716 = vld [vmem:[#allocation5 + $0x12d8] sm:$0xff]
    %v717 = vld [vmem:[#allocation5 + $0x12e0] sm:$0xff]
    %v718 = vld [vmem:[#allocation5 + $0x12e8] sm:$0xff]
    %v719 = vld [vmem:[#allocation5 + $0x12f0] sm:$0xff]
    %v720 = vld [vmem:[#allocation5 + $0x12f8] sm:$0xff]
    %v721 = vld [vmem:[#allocation5 + $0x1300] sm:$0xff]
    %v722 = vld [vmem:[#allocation5 + $0x1308] sm:$0xff]
    %v723 = vld [vmem:[#allocation5 + $0x1310] sm:$0xff]
    %v724 = vld [vmem:[#allocation5 + $0x1318] sm:$0xff]
    %v725 = vld [vmem:[#allocation5 + $0x1320] sm:$0xff]
    %v726 = vld [vmem:[#allocation5 + $0x1328] sm:$0xff]
    %v727 = vld [vmem:[#allocation5 + $0x1330] sm:$0xff]
    %v728 = vld [vmem:[#allocation5 + $0x1338] sm:$0xff]
    %v729 = vld [vmem:[#allocation5 + $0x1340] sm:$0xff]
    %v730 = vld [vmem:[#allocation5 + $0x1348] sm:$0xff]
    %v731 = vld [vmem:[#allocation5 + $0x1350] sm:$0xff]
    %v732 = vld [vmem:[#allocation5 + $0x1358] sm:$0xff]
    %v733 = vld [vmem:[#allocation5 + $0x1360] sm:$0xff]
    %v734 = vld [vmem:[#allocation5 + $0x1368] sm:$0xff]
    %v735 = vld [vmem:[#allocation5 + $0x1370] sm:$0xff]
    %v736 = vld [vmem:[#allocation5 + $0x1378] sm:$0xff]
    %v737 = vld [vmem:[#allocation5 + $0x1380] sm:$0xff]
    %v738 = vld [vmem:[#allocation5 + $0x1388] sm:$0xff]
    %v739 = vld [vmem:[#allocation5 + $0x1390] sm:$0xff]
    %v740 = vld [vmem:[#allocation5 + $0x1398] sm:$0xff]
    %v741 = vld [vmem:[#allocation5 + $0x13a0] sm:$0xff]
    %v742 = vld [vmem:[#allocation5 + $0x13a8] sm:$0xff]
    %v743 = vld [vmem:[#allocation5 + $0x13b0] sm:$0xff]
    %v744 = vld [vmem:[#allocation5 + $0x13b8] sm:$0xff]
    %v745 = vld [vmem:[#allocation5 + $0x13c0] sm:$0xff]
    %v746 = vld [vmem:[#allocation5 + $0x13c8] sm:$0xff]
    %v747 = vld [vmem:[#allocation5 + $0x13d0] sm:$0xff]
    %v748 = vld [vmem:[#allocation5 + $0x13d8] sm:$0xff]
    %v749 = vld [vmem:[#allocation5 + $0x13e0] sm:$0xff]
    %v750 = vld [vmem:[#allocation5 + $0x13e8] sm:$0xff]
    %v751 = vld [vmem:[#allocation5 + $0x13f0] sm:$0xff]
    %v752 = vld [vmem:[#allocation5 + $0x13f8] sm:$0xff]
    %v753 = vld [vmem:[#allocation5 + $0x1400] sm:$0xff]
    %v754 = vld [vmem:[#allocation5 + $0x1408] sm:$0xff]
    %v755 = vld [vmem:[#allocation5 + $0x1410] sm:$0xff]
    %v756 = vld [vmem:[#allocation5 + $0x1418] sm:$0xff]
    %v757 = vld [vmem:[#allocation5 + $0x1420] sm:$0xff]
    %v758 = vld [vmem:[#allocation5 + $0x1428] sm:$0xff]
    %v759 = vld [vmem:[#allocation5 + $0x1430] sm:$0xff]
    %v760 = vld [vmem:[#allocation5 + $0x1438] sm:$0xff]
    %v761 = vld [vmem:[#allocation5 + $0x1440] sm:$0xff]
    %v762 = vld [vmem:[#allocation5 + $0x1448] sm:$0xff]
    %v763 = vld [vmem:[#allocation5 + $0x1450] sm:$0xff]
    %v764 = vld [vmem:[#allocation5 + $0x1458] sm:$0xff]
    %v765 = vld [vmem:[#allocation5 + $0x1460] sm:$0xff]
    %v766 = vld [vmem:[#allocation5 + $0x1468] sm:$0xff]
    %v767 = vld [vmem:[#allocation5 + $0x1470] sm:$0xff]
    %v768 = vld [vmem:[#allocation5 + $0x1478] sm:$0xff]
    %v769 = vld [vmem:[#allocation5 + $0x1480] sm:$0xff]
    %v770 = vld [vmem:[#allocation5 + $0x1488] sm:$0xff]
    %v771 = vld [vmem:[#allocation5 + $0x1490] sm:$0xff]
    %v772 = vld [vmem:[#allocation5 + $0x1498] sm:$0xff]
    %v773 = vld [vmem:[#allocation5 + $0x14a0] sm:$0xff]
    %v774 = vld [vmem:[#allocation5 + $0x14a8] sm:$0xff]
    %v775 = vld [vmem:[#allocation5 + $0x14b0] sm:$0xff]
    %v776 = vld [vmem:[#allocation5 + $0x14b8] sm:$0xff]
    %v777 = vld [vmem:[#allocation5 + $0x14c0] sm:$0xff]
    %v778 = vld [vmem:[#allocation5 + $0x14c8] sm:$0xff]
    %v779 = vld [vmem:[#allocation5 + $0x14d0] sm:$0xff]
    %v780 = vld [vmem:[#allocation5 + $0x14d8] sm:$0xff]
    %v781 = vld [vmem:[#allocation5 + $0x14e0] sm:$0xff]
    %v782 = vld [vmem:[#allocation5 + $0x14e8] sm:$0xff]
    %v783 = vld [vmem:[#allocation5 + $0x14f0] sm:$0xff]
    %v784 = vld [vmem:[#allocation5 + $0x14f8] sm:$0xff]
    %v785 = vld [vmem:[#allocation5 + $0x1500] sm:$0xff]
    %v786 = vld [vmem:[#allocation5 + $0x1508] sm:$0xff]
    %v787 = vld [vmem:[#allocation5 + $0x1510] sm:$0xff]
    %v788 = vld [vmem:[#allocation5 + $0x1518] sm:$0xff]
    %v789 = vld [vmem:[#allocation5 + $0x1520] sm:$0xff]
    %v790 = vld [vmem:[#allocation5 + $0x1528] sm:$0xff]
    %v791 = vld [vmem:[#allocation5 + $0x1530] sm:$0xff]
    %v792 = vld [vmem:[#allocation5 + $0x1538] sm:$0xff]
    %v793 = vld [vmem:[#allocation5 + $0x1540] sm:$0xff]
    %v794 = vld [vmem:[#allocation5 + $0x1548] sm:$0xff]
    %v795 = vld [vmem:[#allocation5 + $0x1550] sm:$0xff]
    %v796 = vld [vmem:[#allocation5 + $0x1558] sm:$0xff]
    %v797 = vld [vmem:[#allocation5 + $0x1560] sm:$0xff]
    %v798 = vld [vmem:[#allocation5 + $0x1568] sm:$0xff]
    %v799 = vld [vmem:[#allocation5 + $0x1570] sm:$0xff]
    %v800 = vld [vmem:[#allocation5 + $0x1578] sm:$0xff]
    %v801 = vld [vmem:[#allocation5 + $0x1580] sm:$0xff]
    %v802 = vld [vmem:[#allocation5 + $0x1588] sm:$0xff]
    %v803 = vld [vmem:[#allocation5 + $0x1590] sm:$0xff]
    %v804 = vld [vmem:[#allocation5 + $0x1598] sm:$0xff]
    %v805 = vld [vmem:[#allocation5 + $0x15a0] sm:$0xff]
    %v806 = vld [vmem:[#allocation5 + $0x15a8] sm:$0xff]
    %v807 = vld [vmem:[#allocation5 + $0x15b0] sm:$0xff]
    %v808 = vld [vmem:[#allocation5 + $0x15b8] sm:$0xff]
    %v809 = vld [vmem:[#allocation5 + $0x15c0] sm:$0xff]
    %v810 = vld [vmem:[#allocation5 + $0x15c8] sm:$0xff]
    %v811 = vld [vmem:[#allocation5 + $0x15d0] sm:$0xff]
    %v812 = vld [vmem:[#allocation5 + $0x15d8] sm:$0xff]
    %v813 = vld [vmem:[#allocation5 + $0x15e0] sm:$0xff]
    %v814 = vld [vmem:[#allocation5 + $0x15e8] sm:$0xff]
    %v815 = vld [vmem:[#allocation5 + $0x15f0] sm:$0xff]
    %v816 = vld [vmem:[#allocation5 + $0x15f8] sm:$0xff]
    %v817 = vld [vmem:[#allocation5 + $0x1600] sm:$0xff]
    %v818 = vld [vmem:[#allocation5 + $0x1608] sm:$0xff]
    %v819 = vld [vmem:[#allocation5 + $0x1610] sm:$0xff]
    %v820 = vld [vmem:[#allocation5 + $0x1618] sm:$0xff]
    %v821 = vld [vmem:[#allocation5 + $0x1620] sm:$0xff]
    %v822 = vld [vmem:[#allocation5 + $0x1628] sm:$0xff]
    %v823 = vld [vmem:[#allocation5 + $0x1630] sm:$0xff]
    %v824 = vld [vmem:[#allocation5 + $0x1638] sm:$0xff]
    %v825 = vld [vmem:[#allocation5 + $0x1640] sm:$0xff]
    %v826 = vld [vmem:[#allocation5 + $0x1648] sm:$0xff]
    %v827 = vld [vmem:[#allocation5 + $0x1650] sm:$0xff]
    %v828 = vld [vmem:[#allocation5 + $0x1658] sm:$0xff]
    %v829 = vld [vmem:[#allocation5 + $0x1660] sm:$0xff]
    %v830 = vld [vmem:[#allocation5 + $0x1668] sm:$0xff]
    %v831 = vld [vmem:[#allocation5 + $0x1670] sm:$0xff]
    %v832 = vld [vmem:[#allocation5 + $0x1678] sm:$0xff]
    %v833 = vld [vmem:[#allocation5 + $0x1680] sm:$0xff]
    %v834 = vld [vmem:[#allocation5 + $0x1688] sm:$0xff]
    %v835 = vld [vmem:[#allocation5 + $0x1690] sm:$0xff]
    %v836 = vld [vmem:[#allocation5 + $0x1698] sm:$0xff]
    %v837 = vld [vmem:[#allocation5 + $0x16a0] sm:$0xff]
    %v838 = vld [vmem:[#allocation5 + $0x16a8] sm:$0xff]
    %v839 = vld [vmem:[#allocation5 + $0x16b0] sm:$0xff]
    %v840 = vld [vmem:[#allocation5 + $0x16b8] sm:$0xff]
    %v841 = vld [vmem:[#allocation5 + $0x16c0] sm:$0xff]
    %v842 = vld [vmem:[#allocation5 + $0x16c8] sm:$0xff]
    %v843 = vld [vmem:[#allocation5 + $0x16d0] sm:$0xff]
    %v844 = vld [vmem:[#allocation5 + $0x16d8] sm:$0xff]
    %v845 = vld [vmem:[#allocation5 + $0x16e0] sm:$0xff]
    %v846 = vld [vmem:[#allocation5 + $0x16e8] sm:$0xff]
    %v847 = vld [vmem:[#allocation5 + $0x16f0] sm:$0xff]
    %v848 = vld [vmem:[#allocation5 + $0x16f8] sm:$0xff]
    %v849 = vld [vmem:[#allocation5 + $0x1700] sm:$0xff]
    %v850 = vld [vmem:[#allocation5 + $0x1708] sm:$0xff]
    %v851 = vld [vmem:[#allocation5 + $0x1710] sm:$0xff]
    %v852 = vld [vmem:[#allocation5 + $0x1718] sm:$0xff]
    %v853 = vld [vmem:[#allocation5 + $0x1720] sm:$0xff]
    %v854 = vld [vmem:[#allocation5 + $0x1728] sm:$0xff]
    %v855 = vld [vmem:[#allocation5 + $0x1730] sm:$0xff]
    %v856 = vld [vmem:[#allocation5 + $0x1738] sm:$0xff]
    %v857 = vld [vmem:[#allocation5 + $0x1740] sm:$0xff]
    %v858 = vld [vmem:[#allocation5 + $0x1748] sm:$0xff]
    %v859 = vld [vmem:[#allocation5 + $0x1750] sm:$0xff]
    %v860 = vld [vmem:[#allocation5 + $0x1758] sm:$0xff]
    %v861 = vld [vmem:[#allocation5 + $0x1760] sm:$0xff]
    %v862 = vld [vmem:[#allocation5 + $0x1768] sm:$0xff]
    %v863 = vld [vmem:[#allocation5 + $0x1770] sm:$0xff]
    %v864 = vld [vmem:[#allocation5 + $0x1778] sm:$0xff]
    %v865 = vld [vmem:[#allocation5 + $0x1780] sm:$0xff]
    %v866 = vld [vmem:[#allocation5 + $0x1788] sm:$0xff]
    %v867 = vld [vmem:[#allocation5 + $0x1790] sm:$0xff]
    %v868 = vld [vmem:[#allocation5 + $0x1798] sm:$0xff]
    %v869 = vld [vmem:[#allocation5 + $0x17a0] sm:$0xff]
    %v870 = vld [vmem:[#allocation5 + $0x17a8] sm:$0xff]
    %v871 = vld [vmem:[#allocation5 + $0x17b0] sm:$0xff]
    %v872 = vld [vmem:[#allocation5 + $0x17b8] sm:$0xff]
    %v873 = vld [vmem:[#allocation5 + $0x17c0] sm:$0xff]
    %v874 = vld [vmem:[#allocation5 + $0x17c8] sm:$0xff]
    %v875 = vld [vmem:[#allocation5 + $0x17d0] sm:$0xff]
    %v876 = vld [vmem:[#allocation5 + $0x17d8] sm:$0xff]
    %v877 = vld [vmem:[#allocation5 + $0x17e0] sm:$0xff]
    %v878 = vld [vmem:[#allocation5 + $0x17e8] sm:$0xff]
    %v879 = vld [vmem:[#allocation5 + $0x17f0] sm:$0xff]
    %v880 = vld [vmem:[#allocation5 + $0x17f8] sm:$0xff]
    %v881 = vld [vmem:[#allocation5 + $0x1800] sm:$0xff]
    %v882 = vld [vmem:[#allocation5 + $0x1808] sm:$0xff]
    %v883 = vld [vmem:[#allocation5 + $0x1810] sm:$0xff]
    %v884 = vld [vmem:[#allocation5 + $0x1818] sm:$0xff]
    %v885 = vld [vmem:[#allocation5 + $0x1820] sm:$0xff]
    %v886 = vld [vmem:[#allocation5 + $0x1828] sm:$0xff]
    %v887 = vld [vmem:[#allocation5 + $0x1830] sm:$0xff]
    %v888 = vld [vmem:[#allocation5 + $0x1838] sm:$0xff]
    %v889 = vld [vmem:[#allocation5 + $0x1840] sm:$0xff]
    %v890 = vld [vmem:[#allocation5 + $0x1848] sm:$0xff]
    %v891 = vld [vmem:[#allocation5 + $0x1850] sm:$0xff]
    %v892 = vld [vmem:[#allocation5 + $0x1858] sm:$0xff]
    %v893 = vld [vmem:[#allocation5 + $0x1860] sm:$0xff]
    %v894 = vld [vmem:[#allocation5 + $0x1868] sm:$0xff]
    %v895 = vld [vmem:[#allocation5 + $0x1870] sm:$0xff]
    %v896 = vld [vmem:[#allocation5 + $0x1878] sm:$0xff]
    %v897 = vld [vmem:[#allocation5 + $0x1880] sm:$0xff]
    %v898 = vld [vmem:[#allocation5 + $0x1888] sm:$0xff]
    %v899 = vld [vmem:[#allocation5 + $0x1890] sm:$0xff]
    %v900 = vld [vmem:[#allocation5 + $0x1898] sm:$0xff]
    %v901 = vld [vmem:[#allocation5 + $0x18a0] sm:$0xff]
    %v902 = vld [vmem:[#allocation5 + $0x18a8] sm:$0xff]
    %v903 = vld [vmem:[#allocation5 + $0x18b0] sm:$0xff]
    %v904 = vld [vmem:[#allocation5 + $0x18b8] sm:$0xff]
    %v905 = vld [vmem:[#allocation5 + $0x18c0] sm:$0xff]
    %v906 = vld [vmem:[#allocation5 + $0x18c8] sm:$0xff]
    %v907 = vld [vmem:[#allocation5 + $0x18d0] sm:$0xff]
    %v908 = vld [vmem:[#allocation5 + $0x18d8] sm:$0xff]
    %v909 = vld [vmem:[#allocation5 + $0x18e0] sm:$0xff]
    %v910 = vld [vmem:[#allocation5 + $0x18e8] sm:$0xff]
    %v911 = vld [vmem:[#allocation5 + $0x18f0] sm:$0xff]
    %v912 = vld [vmem:[#allocation5 + $0x18f8] sm:$0xff]
    %v913 = vld [vmem:[#allocation5 + $0x1900] sm:$0xff]
    %v914 = vld [vmem:[#allocation5 + $0x1908] sm:$0xff]
    %v915 = vld [vmem:[#allocation5 + $0x1910] sm:$0xff]
    %v916 = vld [vmem:[#allocation5 + $0x1918] sm:$0xff]
    %v917 = vld [vmem:[#allocation5 + $0x1920] sm:$0xff]
    %v918 = vld [vmem:[#allocation5 + $0x1928] sm:$0xff]
    %v919 = vld [vmem:[#allocation5 + $0x1930] sm:$0xff]
    %v920 = vld [vmem:[#allocation5 + $0x1938] sm:$0xff]
    %v921 = vld [vmem:[#allocation5 + $0x1940] sm:$0xff]
    %v922 = vld [vmem:[#allocation5 + $0x1948] sm:$0xff]
    %v923 = vld [vmem:[#allocation5 + $0x1950] sm:$0xff]
    %v924 = vld [vmem:[#allocation5 + $0x1958] sm:$0xff]
    %v925 = vld [vmem:[#allocation5 + $0x1960] sm:$0xff]
    %v926 = vld [vmem:[#allocation5 + $0x1968] sm:$0xff]
    %v927 = vld [vmem:[#allocation5 + $0x1970] sm:$0xff]
    %v928 = vld [vmem:[#allocation5 + $0x1978] sm:$0xff]
    %v929 = vld [vmem:[#allocation5 + $0x1980] sm:$0xff]
    %v930 = vld [vmem:[#allocation5 + $0x1988] sm:$0xff]
    %v931 = vld [vmem:[#allocation5 + $0x1990] sm:$0xff]
    %v932 = vld [vmem:[#allocation5 + $0x1998] sm:$0xff]
    %v933 = vld [vmem:[#allocation5 + $0x19a0] sm:$0xff]
    %v934 = vld [vmem:[#allocation5 + $0x19a8] sm:$0xff]
    %v935 = vld [vmem:[#allocation5 + $0x19b0] sm:$0xff]
    %v936 = vld [vmem:[#allocation5 + $0x19b8] sm:$0xff]
    %v937 = vld [vmem:[#allocation5 + $0x19c0] sm:$0xff]
    %v938 = vld [vmem:[#allocation5 + $0x19c8] sm:$0xff]
    %v939 = vld [vmem:[#allocation5 + $0x19d0] sm:$0xff]
    %v940 = vld [vmem:[#allocation5 + $0x19d8] sm:$0xff]
    %v941 = vld [vmem:[#allocation5 + $0x19e0] sm:$0xff]
    %v942 = vld [vmem:[#allocation5 + $0x19e8] sm:$0xff]
    %v943 = vld [vmem:[#allocation5 + $0x19f0] sm:$0xff]
    %v944 = vld [vmem:[#allocation5 + $0x19f8] sm:$0xff]
    %v945 = vld [vmem:[#allocation5 + $0x1a00] sm:$0xff]
    %v946 = vld [vmem:[#allocation5 + $0x1a08] sm:$0xff]
    %v947 = vld [vmem:[#allocation5 + $0x1a10] sm:$0xff]
    %v948 = vld [vmem:[#allocation5 + $0x1a18] sm:$0xff]
    %v949 = vld [vmem:[#allocation5 + $0x1a20] sm:$0xff]
    %v950 = vld [vmem:[#allocation5 + $0x1a28] sm:$0xff]
    %v951 = vld [vmem:[#allocation5 + $0x1a30] sm:$0xff]
    %v952 = vld [vmem:[#allocation5 + $0x1a38] sm:$0xff]
    %v953 = vld [vmem:[#allocation5 + $0x1a40] sm:$0xff]
    %v954 = vld [vmem:[#allocation5 + $0x1a48] sm:$0xff]
    %v955 = vld [vmem:[#allocation5 + $0x1a50] sm:$0xff]
    %v956 = vld [vmem:[#allocation5 + $0x1a58] sm:$0xff]
    %v957 = vld [vmem:[#allocation5 + $0x1a60] sm:$0xff]
    %v958 = vld [vmem:[#allocation5 + $0x1a68] sm:$0xff]
    %v959 = vld [vmem:[#allocation5 + $0x1a70] sm:$0xff]
    %v960 = vld [vmem:[#allocation5 + $0x1a78] sm:$0xff]
    %v961 = vld [vmem:[#allocation5 + $0x1a80] sm:$0xff]
    %v962 = vld [vmem:[#allocation5 + $0x1a88] sm:$0xff]
    %v963 = vld [vmem:[#allocation5 + $0x1a90] sm:$0xff]
    %v964 = vld [vmem:[#allocation5 + $0x1a98] sm:$0xff]
    %v965 = vld [vmem:[#allocation5 + $0x1aa0] sm:$0xff]
    %v966 = vld [vmem:[#allocation5 + $0x1aa8] sm:$0xff]
    %v967 = vld [vmem:[#allocation5 + $0x1ab0] sm:$0xff]
    %v968 = vld [vmem:[#allocation5 + $0x1ab8] sm:$0xff]
    %v969 = vld [vmem:[#allocation5 + $0x1ac0] sm:$0xff]
    %v970 = vld [vmem:[#allocation5 + $0x1ac8] sm:$0xff]
    %v971 = vld [vmem:[#allocation5 + $0x1ad0] sm:$0xff]
    %v972 = vld [vmem:[#allocation5 + $0x1ad8] sm:$0xff]
    %v973 = vld [vmem:[#allocation5 + $0x1ae0] sm:$0xff]
    %v974 = vld [vmem:[#allocation5 + $0x1ae8] sm:$0xff]
    %v975 = vld [vmem:[#allocation5 + $0x1af0] sm:$0xff]
    %v976 = vld [vmem:[#allocation5 + $0x1af8] sm:$0xff]
    %v977 = vld [vmem:[#allocation5 + $0x1b00] sm:$0xff]
    %v978 = vld [vmem:[#allocation5 + $0x1b08] sm:$0xff]
    %v979 = vld [vmem:[#allocation5 + $0x1b10] sm:$0xff]
    %v980 = vld [vmem:[#allocation5 + $0x1b18] sm:$0xff]
    %v981 = vld [vmem:[#allocation5 + $0x1b20] sm:$0xff]
    %v982 = vld [vmem:[#allocation5 + $0x1b28] sm:$0xff]
    %v983 = vld [vmem:[#allocation5 + $0x1b30] sm:$0xff]
    %v984 = vld [vmem:[#allocation5 + $0x1b38] sm:$0xff]
    %v985 = vld [vmem:[#allocation5 + $0x1b40] sm:$0xff]
    %v986 = vld [vmem:[#allocation5 + $0x1b48] sm:$0xff]
    %v987 = vld [vmem:[#allocation5 + $0x1b50] sm:$0xff]
    %v988 = vld [vmem:[#allocation5 + $0x1b58] sm:$0xff]
    %v989 = vld [vmem:[#allocation5 + $0x1b60] sm:$0xff]
    %v990 = vld [vmem:[#allocation5 + $0x1b68] sm:$0xff]
    %v991 = vld [vmem:[#allocation5 + $0x1b70] sm:$0xff]
    %v992 = vld [vmem:[#allocation5 + $0x1b78] sm:$0xff]
    %v993 = vld [vmem:[#allocation5 + $0x1b80] sm:$0xff]
    %v994 = vld [vmem:[#allocation5 + $0x1b88] sm:$0xff]
    %v995 = vld [vmem:[#allocation5 + $0x1b90] sm:$0xff]
    %v996 = vld [vmem:[#allocation5 + $0x1b98] sm:$0xff]
    %v997 = vld [vmem:[#allocation5 + $0x1ba0] sm:$0xff]
    %v998 = vld [vmem:[#allocation5 + $0x1ba8] sm:$0xff]
    %v999 = vld [vmem:[#allocation5 + $0x1bb0] sm:$0xff]
    %v1000 = vld [vmem:[#allocation5 + $0x1bb8] sm:$0xff]
    %v1001 = vld [vmem:[#allocation5 + $0x1bc0] sm:$0xff]
    %v1002 = vld [vmem:[#allocation5 + $0x1bc8] sm:$0xff]
    %v1003 = vld [vmem:[#allocation5 + $0x1bd0] sm:$0xff]
    %v1004 = vld [vmem:[#allocation5 + $0x1bd8] sm:$0xff]
    %v1005 = vld [vmem:[#allocation5 + $0x1be0] sm:$0xff]
    %v1006 = vld [vmem:[#allocation5 + $0x1be8] sm:$0xff]
    %v1007 = vld [vmem:[#allocation5 + $0x1bf0] sm:$0xff]
    %v1008 = vld [vmem:[#allocation5 + $0x1bf8] sm:$0xff]
    %v1009 = vld [vmem:[#allocation5 + $0x1c00] sm:$0xff]
    %v1010 = vld [vmem:[#allocation5 + $0x1c08] sm:$0xff]
    %v1011 = vld [vmem:[#allocation5 + $0x1c10] sm:$0xff]
    %v1012 = vld [vmem:[#allocation5 + $0x1c18] sm:$0xff]
    %v1013 = vld [vmem:[#allocation5 + $0x1c20] sm:$0xff]
    %v1014 = vld [vmem:[#allocation5 + $0x1c28] sm:$0xff]
    %v1015 = vld [vmem:[#allocation5 + $0x1c30] sm:$0xff]
    %v1016 = vld [vmem:[#allocation5 + $0x1c38] sm:$0xff]
    %v1017 = vld [vmem:[#allocation5 + $0x1c40] sm:$0xff]
    %v1018 = vld [vmem:[#allocation5 + $0x1c48] sm:$0xff]
    %v1019 = vld [vmem:[#allocation5 + $0x1c50] sm:$0xff]
    %v1020 = vld [vmem:[#allocation5 + $0x1c58] sm:$0xff]
    %v1021 = vld [vmem:[#allocation5 + $0x1c60] sm:$0xff]
    %v1022 = vld [vmem:[#allocation5 + $0x1c68] sm:$0xff]
    %v1023 = vld [vmem:[#allocation5 + $0x1c70] sm:$0xff]
    %v1024 = vld [vmem:[#allocation5 + $0x1c78] sm:$0xff]
    %v1025 = vld [vmem:[#allocation5 + $0x1c80] sm:$0xff]
    %v1026 = vld [vmem:[#allocation5 + $0x1c88] sm:$0xff]
    %v1027 = vld [vmem:[#allocation5 + $0x1c90] sm:$0xff]
    %v1028 = vld [vmem:[#allocation5 + $0x1c98] sm:$0xff]
    %v1029 = vld [vmem:[#allocation5 + $0x1ca0] sm:$0xff]
    %v1030 = vld [vmem:[#allocation5 + $0x1ca8] sm:$0xff]
    %v1031 = vld [vmem:[#allocation5 + $0x1cb0] sm:$0xff]
    %v1032 = vld [vmem:[#allocation5 + $0x1cb8] sm:$0xff]
    %v1033 = vld [vmem:[#allocation5 + $0x1cc0] sm:$0xff]
    %v1034 = vld [vmem:[#allocation5 + $0x1cc8] sm:$0xff]
    %v1035 = vld [vmem:[#allocation5 + $0x1cd0] sm:$0xff]
    %v1036 = vld [vmem:[#allocation5 + $0x1cd8] sm:$0xff]
    %v1037 = vld [vmem:[#allocation5 + $0x1ce0] sm:$0xff]
    %v1038 = vld [vmem:[#allocation5 + $0x1ce8] sm:$0xff]
    %v1039 = vld [vmem:[#allocation5 + $0x1cf0] sm:$0xff]
    %v1040 = vld [vmem:[#allocation5 + $0x1cf8] sm:$0xff]
    %v1041 = vld [vmem:[#allocation5 + $0x1d00] sm:$0xff]
    %v1042 = vld [vmem:[#allocation5 + $0x1d08] sm:$0xff]
    %v1043 = vld [vmem:[#allocation5 + $0x1d10] sm:$0xff]
    %v1044 = vld [vmem:[#allocation5 + $0x1d18] sm:$0xff]
    %v1045 = vld [vmem:[#allocation5 + $0x1d20] sm:$0xff]
    %v1046 = vld [vmem:[#allocation5 + $0x1d28] sm:$0xff]
    %v1047 = vld [vmem:[#allocation5 + $0x1d30] sm:$0xff]
    %v1048 = vld [vmem:[#allocation5 + $0x1d38] sm:$0xff]
    %v1049 = vld [vmem:[#allocation5 + $0x1d40] sm:$0xff]
    %v1050 = vld [vmem:[#allocation5 + $0x1d48] sm:$0xff]
    %v1051 = vld [vmem:[#allocation5 + $0x1d50] sm:$0xff]
    %v1052 = vld [vmem:[#allocation5 + $0x1d58] sm:$0xff]
    %v1053 = vld [vmem:[#allocation5 + $0x1d60] sm:$0xff]
    %v1054 = vld [vmem:[#allocation5 + $0x1d68] sm:$0xff]
    %v1055 = vld [vmem:[#allocation5 + $0x1d70] sm:$0xff]
    %v1056 = vld [vmem:[#allocation5 + $0x1d78] sm:$0xff]
    %v1057 = vld [vmem:[#allocation5 + $0x1d80] sm:$0xff]
    %v1058 = vld [vmem:[#allocation5 + $0x1d88] sm:$0xff]
    %v1059 = vld [vmem:[#allocation5 + $0x1d90] sm:$0xff]
    %v1060 = vld [vmem:[#allocation5 + $0x1d98] sm:$0xff]
    %v1061 = vld [vmem:[#allocation5 + $0x1da0] sm:$0xff]
    %v1062 = vld [vmem:[#allocation5 + $0x1da8] sm:$0xff]
    %v1063 = vld [vmem:[#allocation5 + $0x1db0] sm:$0xff]
    %v1064 = vld [vmem:[#allocation5 + $0x1db8] sm:$0xff]
    %v1065 = vld [vmem:[#allocation5 + $0x1dc0] sm:$0xff]
    %v1066 = vld [vmem:[#allocation5 + $0x1dc8] sm:$0xff]
    %v1067 = vld [vmem:[#allocation5 + $0x1dd0] sm:$0xff]
    %v1068 = vld [vmem:[#allocation5 + $0x1dd8] sm:$0xff]
    %v1069 = vld [vmem:[#allocation5 + $0x1de0] sm:$0xff]
    %v1070 = vld [vmem:[#allocation5 + $0x1de8] sm:$0xff]
    %v1071 = vld [vmem:[#allocation5 + $0x1df0] sm:$0xff]
    %v1072 = vld [vmem:[#allocation5 + $0x1df8] sm:$0xff]
    %v1073 = vld [vmem:[#allocation7] sm:$0x3]
    %v1075 = vlaneseq
    %v1076 = vshrl.u32 %v1075, 7
    %v1077 = vsub.s32 0, %v1076
    %v1078 = vrot.slane %v1073, %v1077
    %v1079 = vlaneseq
    %v1080 = vshrl.u32 %v1079, 7
    %v1081 = vsub.s32 1, %v1080
    %v1082 = vrot.slane %v1073, %v1081
    %1085 = vmatprep.subr.mxu0 %v114
    %1086 = vmatpush1.msra.mxu0 %v113
    %1087 = vmatprep.subr.mxu0 %v116
    %1088 = vmatpush1.msra.mxu0 %v115
    %1089 = vmatprep.subr.mxu0 %v118
    %1090 = vmatpush1.msra.mxu0 %v117
    %1091 = vmatprep.subr.mxu0 %v120
    %1092 = vmatpush1.msra.mxu0 %v119
    %1093 = vmatprep.subr.mxu0 %v122
    %1094 = vmatpush1.msra.mxu0 %v121
    %1095 = vmatprep.subr.mxu0 %v124
    %1096 = vmatpush1.msra.mxu0 %v123
    %1097 = vmatprep.subr.mxu0 %v126
    %1098 = vmatpush1.msra.mxu0 %v125
    %1099 = vmatprep.subr.mxu0 %v128
    %1100 = vmatpush1.msra.mxu0 %v127
    %1101 = vmatprep.subr.mxu0 %v130
    %1102 = vmatpush1.msra.mxu0 %v129
    %1103 = vmatprep.subr.mxu0 %v132
    %1104 = vmatpush1.msra.mxu0 %v131
    %1105 = vmatprep.subr.mxu0 %v134
    %1106 = vmatpush1.msra.mxu0 %v133
    %1107 = vmatprep.subr.mxu0 %v136
    %1108 = vmatpush1.msra.mxu0 %v135
    %1109 = vmatprep.subr.mxu0 %v138
    %1110 = vmatpush1.msra.mxu0 %v137
    %1111 = vmatprep.subr.mxu0 %v140
    %1112 = vmatpush1.msra.mxu0 %v139
    %1113 = vmatprep.subr.mxu0 %v142
    %1114 = vmatpush1.msra.mxu0 %v141
    %1115 = vmatprep.subr.mxu0 %v144
    %1116 = vmatpush1.msra.mxu0 %v143
    %1117 = vmatprep.subr.mxu0 %v146
    %1118 = vmatpush1.msra.mxu0 %v145
    %1119 = vmatprep.subr.mxu0 %v148
    %1120 = vmatpush1.msra.mxu0 %v147
    %1121 = vmatprep.subr.mxu0 %v150
    %1122 = vmatpush1.msra.mxu0 %v149
    %1123 = vmatprep.subr.mxu0 %v152
    %1124 = vmatpush1.msra.mxu0 %v151
    %1125 = vmatprep.subr.mxu0 %v154
    %1126 = vmatpush1.msra.mxu0 %v153
    %1127 = vmatprep.subr.mxu0 %v156
    %1128 = vmatpush1.msra.mxu0 %v155
    %1129 = vmatprep.subr.mxu0 %v158
    %1130 = vmatpush1.msra.mxu0 %v157
    %1131 = vmatprep.subr.mxu0 %v160
    %1132 = vmatpush1.msra.mxu0 %v159
    %1133 = vmatprep.subr.mxu0 %v162
    %1134 = vmatpush1.msra.mxu0 %v161
    %1135 = vmatprep.subr.mxu0 %v164
    %1136 = vmatpush1.msra.mxu0 %v163
    %1137 = vmatprep.subr.mxu0 %v166
    %1138 = vmatpush1.msra.mxu0 %v165
    %1139 = vmatprep.subr.mxu0 %v168
    %1140 = vmatpush1.msra.mxu0 %v167
    %1141 = vmatprep.subr.mxu0 %v170
    %1142 = vmatpush1.msra.mxu0 %v169
    %1143 = vmatprep.subr.mxu0 %v172
    %1144 = vmatpush1.msra.mxu0 %v171
    %1145 = vmatprep.subr.mxu0 %v174
    %1146 = vmatpush1.msra.mxu0 %v173
    %1147 = vmatprep.subr.mxu0 %v176
    %1148 = vmatpush1.msra.mxu0 %v175
    %1149 = vmatprep.mubr.f32.mxu0 %v84
    %1150 = vmatmul.mubr.f32.gmra.mrb[0].mxu0 %v83
    %v1151 = vpop.f32.mrb[0].mxu0
    %v1152 = vadd.f32 %v1078, %v1151
    %v1153 = vpop.f32.mrb[0].mxu0
    %v1154 = vadd.f32 %v1082, %v1153
    %1155 = vdwg.mxu0
    %1156 = vmatprep.subr.mxu0 %v178
    %1157 = vmatpush1.msra.mxu0 %v177
    %1158 = vmatprep.subr.mxu0 %v180
    %1159 = vmatpush1.msra.mxu0 %v179
    %1160 = vmatprep.subr.mxu0 %v182
    %1161 = vmatpush1.msra.mxu0 %v181
    %1162 = vmatprep.subr.mxu0 %v184
    %1163 = vmatpush1.msra.mxu0 %v183
    %1164 = vmatprep.subr.mxu0 %v186
    %1165 = vmatpush1.msra.mxu0 %v185
    %1166 = vmatprep.subr.mxu0 %v188
    %1167 = vmatpush1.msra.mxu0 %v187
    %1168 = vmatprep.subr.mxu0 %v190
    %1169 = vmatpush1.msra.mxu0 %v189
    %1170 = vmatprep.subr.mxu0 %v192
    %1171 = vmatpush1.msra.mxu0 %v191
    %1172 = vmatprep.subr.mxu0 %v194
    %1173 = vmatpush1.msra.mxu0 %v193
    %1174 = vmatprep.subr.mxu0 %v196
    %1175 = vmatpush1.msra.mxu0 %v195
    %1176 = vmatprep.subr.mxu0 %v198
    %1177 = vmatpush1.msra.mxu0 %v197
    %1178 = vmatprep.subr.mxu0 %v200
    %1179 = vmatpush1.msra.mxu0 %v199
    %1180 = vmatprep.subr.mxu0 %v202
    %1181 = vmatpush1.msra.mxu0 %v201
    %1182 = vmatprep.subr.mxu0 %v204
    %1183 = vmatpush1.msra.mxu0 %v203
    %1184 = vmatprep.subr.mxu0 %v206
    %1185 = vmatpush1.msra.mxu0 %v205
    %1186 = vmatprep.subr.mxu0 %v208
    %1187 = vmatpush1.msra.mxu0 %v207
    %1188 = vmatprep.subr.mxu0 %v210
    %1189 = vmatpush1.msra.mxu0 %v209
    %1190 = vmatprep.subr.mxu0 %v212
    %1191 = vmatpush1.msra.mxu0 %v211
    %1192 = vmatprep.subr.mxu0 %v214
    %1193 = vmatpush1.msra.mxu0 %v213
    %1194 = vmatprep.subr.mxu0 %v216
    %1195 = vmatpush1.msra.mxu0 %v215
    %1196 = vmatprep.subr.mxu0 %v218
    %1197 = vmatpush1.msra.mxu0 %v217
    %1198 = vmatprep.subr.mxu0 %v220
    %1199 = vmatpush1.msra.mxu0 %v219
    %1200 = vmatprep.subr.mxu0 %v222
    %1201 = vmatpush1.msra.mxu0 %v221
    %1202 = vmatprep.subr.mxu0 %v224
    %1203 = vmatpush1.msra.mxu0 %v223
    %1204 = vmatprep.subr.mxu0 %v226
    %1205 = vmatpush1.msra.mxu0 %v225
    %1206 = vmatprep.subr.mxu0 %v228
    %1207 = vmatpush1.msra.mxu0 %v227
    %1208 = vmatprep.subr.mxu0 %v230
    %1209 = vmatpush1.msra.mxu0 %v229
    %1210 = vmatprep.subr.mxu0 %v232
    %1211 = vmatpush1.msra.mxu0 %v231
    %1212 = vmatprep.subr.mxu0 %v234
    %1213 = vmatpush1.msra.mxu0 %v233
    %1214 = vmatprep.subr.mxu0 %v236
    %1215 = vmatpush1.msra.mxu0 %v235
    %1216 = vmatprep.subr.mxu0 %v238
    %1217 = vmatpush1.msra.mxu0 %v237
    %1218 = vmatprep.subr.mxu0 %v240
    %1219 = vmatpush1.msra.mxu0 %v239
    %1220 = vmatprep.mubr.f32.mxu0 %v86
    %1221 = vmatmul.mubr.f32.gmra.mrb[0].mxu0 %v85
    %v1222 = vpop.f32.mrb[0].mxu0
    %v1223 = vadd.f32 %v1152, %v1222
    %v1224 = vpop.f32.mrb[0].mxu0
    %v1225 = vadd.f32 %v1154, %v1224
    %1226 = vdwg.mxu0
    %1227 = vmatprep.subr.mxu0 %v242
    %1228 = vmatpush1.msra.mxu0 %v241
    %1229 = vmatprep.subr.mxu0 %v244
    %1230 = vmatpush1.msra.mxu0 %v243
    %1231 = vmatprep.subr.mxu0 %v246
    %1232 = vmatpush1.msra.mxu0 %v245
    %1233 = vmatprep.subr.mxu0 %v248
    %1234 = vmatpush1.msra.mxu0 %v247
    %1235 = vmatprep.subr.mxu0 %v250
    %1236 = vmatpush1.msra.mxu0 %v249
    %1237 = vmatprep.subr.mxu0 %v252
    %1238 = vmatpush1.msra.mxu0 %v251
    %1239 = vmatprep.subr.mxu0 %v254
    %1240 = vmatpush1.msra.mxu0 %v253
    %1241 = vmatprep.subr.mxu0 %v256
    %1242 = vmatpush1.msra.mxu0 %v255
    %1243 = vmatprep.subr.mxu0 %v258
    %1244 = vmatpush1.msra.mxu0 %v257
    %1245 = vmatprep.subr.mxu0 %v260
    %1246 = vmatpush1.msra.mxu0 %v259
    %1247 = vmatprep.subr.mxu0 %v262
    %1248 = vmatpush1.msra.mxu0 %v261
    %1249 = vmatprep.subr.mxu0 %v264
    %1250 = vmatpush1.msra.mxu0 %v263
    %1251 = vmatprep.subr.mxu0 %v266
    %1252 = vmatpush1.msra.mxu0 %v265
    %1253 = vmatprep.subr.mxu0 %v268
    %1254 = vmatpush1.msra.mxu0 %v267
    %1255 = vmatprep.subr.mxu0 %v270
    %1256 = vmatpush1.msra.mxu0 %v269
    %1257 = vmatprep.subr.mxu0 %v272
    %1258 = vmatpush1.msra.mxu0 %v271
    %1259 = vmatprep.subr.mxu0 %v274
    %1260 = vmatpush1.msra.mxu0 %v273
    %1261 = vmatprep.subr.mxu0 %v276
    %1262 = vmatpush1.msra.mxu0 %v275
    %1263 = vmatprep.subr.mxu0 %v278
    %1264 = vmatpush1.msra.mxu0 %v277
    %1265 = vmatprep.subr.mxu0 %v280
    %1266 = vmatpush1.msra.mxu0 %v279
    %1267 = vmatprep.subr.mxu0 %v282
    %1268 = vmatpush1.msra.mxu0 %v281
    %1269 = vmatprep.subr.mxu0 %v284
    %1270 = vmatpush1.msra.mxu0 %v283
    %1271 = vmatprep.subr.mxu0 %v286
    %1272 = vmatpush1.msra.mxu0 %v285
    %1273 = vmatprep.subr.mxu0 %v288
    %1274 = vmatpush1.msra.mxu0 %v287
    %1275 = vmatprep.subr.mxu0 %v290
    %1276 = vmatpush1.msra.mxu0 %v289
    %1277 = vmatprep.subr.mxu0 %v292
    %1278 = vmatpush1.msra.mxu0 %v291
    %1279 = vmatprep.subr.mxu0 %v294
    %1280 = vmatpush1.msra.mxu0 %v293
    %1281 = vmatprep.subr.mxu0 %v296
    %1282 = vmatpush1.msra.mxu0 %v295
    %1283 = vmatprep.subr.mxu0 %v298
    %1284 = vmatpush1.msra.mxu0 %v297
    %1285 = vmatprep.subr.mxu0 %v300
    %1286 = vmatpush1.msra.mxu0 %v299
    %1287 = vmatprep.subr.mxu0 %v302
    %1288 = vmatpush1.msra.mxu0 %v301
    %1289 = vmatprep.subr.mxu0 %v304
    %1290 = vmatpush1.msra.mxu0 %v303
    %1291 = vmatprep.mubr.f32.mxu0 %v88
    %1292 = vmatmul.mubr.f32.gmra.mrb[0].mxu0 %v87
    %v1293 = vpop.f32.mrb[0].mxu0
    %v1294 = vadd.f32 %v1223, %v1293
    %v1295 = vpop.f32.mrb[0].mxu0
    %v1296 = vadd.f32 %v1225, %v1295
    %1297 = vdwg.mxu0
    %1298 = vmatprep.subr.mxu0 %v306
    %1299 = vmatpush1.msra.mxu0 %v305
    %1300 = vmatprep.subr.mxu0 %v308
    %1301 = vmatpush1.msra.mxu0 %v307
    %1302 = vmatprep.subr.mxu0 %v310
    %1303 = vmatpush1.msra.mxu0 %v309
    %1304 = vmatprep.subr.mxu0 %v312
    %1305 = vmatpush1.msra.mxu0 %v311
    %1306 = vmatprep.subr.mxu0 %v314
    %1307 = vmatpush1.msra.mxu0 %v313
    %1308 = vmatprep.subr.mxu0 %v316
    %1309 = vmatpush1.msra.mxu0 %v315
    %1310 = vmatprep.subr.mxu0 %v318
    %1311 = vmatpush1.msra.mxu0 %v317
    %1312 = vmatprep.subr.mxu0 %v320
    %1313 = vmatpush1.msra.mxu0 %v319
    %1314 = vmatprep.subr.mxu0 %v322
    %1315 = vmatpush1.msra.mxu0 %v321
    %1316 = vmatprep.subr.mxu0 %v324
    %1317 = vmatpush1.msra.mxu0 %v323
    %1318 = vmatprep.subr.mxu0 %v326
    %1319 = vmatpush1.msra.mxu0 %v325
    %1320 = vmatprep.subr.mxu0 %v328
    %1321 = vmatpush1.msra.mxu0 %v327
    %1322 = vmatprep.subr.mxu0 %v330
    %1323 = vmatpush1.msra.mxu0 %v329
    %1324 = vmatprep.subr.mxu0 %v332
    %1325 = vmatpush1.msra.mxu0 %v331
    %1326 = vmatprep.subr.mxu0 %v334
    %1327 = vmatpush1.msra.mxu0 %v333
    %1328 = vmatprep.subr.mxu0 %v336
    %1329 = vmatpush1.msra.mxu0 %v335
    %1330 = vmatprep.subr.mxu0 %v338
    %1331 = vmatpush1.msra.mxu0 %v337
    %1332 = vmatprep.subr.mxu0 %v340
    %1333 = vmatpush1.msra.mxu0 %v339
    %1334 = vmatprep.subr.mxu0 %v342
    %1335 = vmatpush1.msra.mxu0 %v341
    %1336 = vmatprep.subr.mxu0 %v344
    %1337 = vmatpush1.msra.mxu0 %v343
    %1338 = vmatprep.subr.mxu0 %v346
    %1339 = vmatpush1.msra.mxu0 %v345
    %1340 = vmatprep.subr.mxu0 %v348
    %1341 = vmatpush1.msra.mxu0 %v347
    %1342 = vmatprep.subr.mxu0 %v350
    %1343 = vmatpush1.msra.mxu0 %v349
    %1344 = vmatprep.subr.mxu0 %v352
    %1345 = vmatpush1.msra.mxu0 %v351
    %1346 = vmatprep.subr.mxu0 %v354
    %1347 = vmatpush1.msra.mxu0 %v353
    %1348 = vmatprep.subr.mxu0 %v356
    %1349 = vmatpush1.msra.mxu0 %v355
    %1350 = vmatprep.subr.mxu0 %v358
    %1351 = vmatpush1.msra.mxu0 %v357
    %1352 = vmatprep.subr.mxu0 %v360
    %1353 = vmatpush1.msra.mxu0 %v359
    %1354 = vmatprep.subr.mxu0 %v362
    %1355 = vmatpush1.msra.mxu0 %v361
    %1356 = vmatprep.subr.mxu0 %v364
    %1357 = vmatpush1.msra.mxu0 %v363
    %1358 = vmatprep.subr.mxu0 %v366
    %1359 = vmatpush1.msra.mxu0 %v365
    %1360 = vmatprep.subr.mxu0 %v368
    %1361 = vmatpush1.msra.mxu0 %v367
    %1362 = vmatprep.mubr.f32.mxu0 %v90
    %1363 = vmatmul.mubr.f32.gmra.mrb[0].mxu0 %v89
    %v1364 = vpop.f32.mrb[0].mxu0
    %v1365 = vadd.f32 %v1294, %v1364
    %v1366 = vpop.f32.mrb[0].mxu0
    %v1367 = vadd.f32 %v1296, %v1366
    %1368 = vdwg.mxu0
    %1369 = vmatprep.subr.mxu0 %v370
    %1370 = vmatpush1.msra.mxu0 %v369
    %1371 = vmatprep.subr.mxu0 %v372
    %1372 = vmatpush1.msra.mxu0 %v371
    %1373 = vmatprep.subr.mxu0 %v374
    %1374 = vmatpush1.msra.mxu0 %v373
    %1375 = vmatprep.subr.mxu0 %v376
    %1376 = vmatpush1.msra.mxu0 %v375
    %1377 = vmatprep.subr.mxu0 %v378
    %1378 = vmatpush1.msra.mxu0 %v377
    %1379 = vmatprep.subr.mxu0 %v380
    %1380 = vmatpush1.msra.mxu0 %v379
    %1381 = vmatprep.subr.mxu0 %v382
    %1382 = vmatpush1.msra.mxu0 %v381
    %1383 = vmatprep.subr.mxu0 %v384
    %1384 = vmatpush1.msra.mxu0 %v383
    %1385 = vmatprep.subr.mxu0 %v386
    %1386 = vmatpush1.msra.mxu0 %v385
    %1387 = vmatprep.subr.mxu0 %v388
    %1388 = vmatpush1.msra.mxu0 %v387
    %1389 = vmatprep.subr.mxu0 %v390
    %1390 = vmatpush1.msra.mxu0 %v389
    %1391 = vmatprep.subr.mxu0 %v392
    %1392 = vmatpush1.msra.mxu0 %v391
    %1393 = vmatprep.subr.mxu0 %v394
    %1394 = vmatpush1.msra.mxu0 %v393
    %1395 = vmatprep.subr.mxu0 %v396
    %1396 = vmatpush1.msra.mxu0 %v395
    %1397 = vmatprep.subr.mxu0 %v398
    %1398 = vmatpush1.msra.mxu0 %v397
    %1399 = vmatprep.subr.mxu0 %v400
    %1400 = vmatpush1.msra.mxu0 %v399
    %1401 = vmatprep.subr.mxu0 %v402
    %1402 = vmatpush1.msra.mxu0 %v401
    %1403 = vmatprep.subr.mxu0 %v404
    %1404 = vmatpush1.msra.mxu0 %v403
    %1405 = vmatprep.subr.mxu0 %v406
    %1406 = vmatpush1.msra.mxu0 %v405
    %1407 = vmatprep.subr.mxu0 %v408
    %1408 = vmatpush1.msra.mxu0 %v407
    %1409 = vmatprep.subr.mxu0 %v410
    %1410 = vmatpush1.msra.mxu0 %v409
    %1411 = vmatprep.subr.mxu0 %v412
    %1412 = vmatpush1.msra.mxu0 %v411
    %1413 = vmatprep.subr.mxu0 %v414
    %1414 = vmatpush1.msra.mxu0 %v413
    %1415 = vmatprep.subr.mxu0 %v416
    %1416 = vmatpush1.msra.mxu0 %v415
    %1417 = vmatprep.subr.mxu0 %v418
    %1418 = vmatpush1.msra.mxu0 %v417
    %1419 = vmatprep.subr.mxu0 %v420
    %1420 = vmatpush1.msra.mxu0 %v419
    %1421 = vmatprep.subr.mxu0 %v422
    %1422 = vmatpush1.msra.mxu0 %v421
    %1423 = vmatprep.subr.mxu0 %v424
    %1424 = vmatpush1.msra.mxu0 %v423
    %1425 = vmatprep.subr.mxu0 %v426
    %1426 = vmatpush1.msra.mxu0 %v425
    %1427 = vmatprep.subr.mxu0 %v428
    %1428 = vmatpush1.msra.mxu0 %v427
    %1429 = vmatprep.subr.mxu0 %v430
    %1430 = vmatpush1.msra.mxu0 %v429
    %1431 = vmatprep.subr.mxu0 %v432
    %1432 = vmatpush1.msra.mxu0 %v431
    %1433 = vmatprep.mubr.f32.mxu0 %v92
    %1434 = vmatmul.mubr.f32.gmra.mrb[0].mxu0 %v91
    %v1435 = vpop.f32.mrb[0].mxu0
    %v1436 = vadd.f32 %v1365, %v1435
    %v1437 = vpop.f32.mrb[0].mxu0
    %v1438 = vadd.f32 %v1367, %v1437
    %1439 = vdwg.mxu0
    %1440 = vmatprep.subr.mxu0 %v434
    %1441 = vmatpush1.msra.mxu0 %v433
    %1442 = vmatprep.subr.mxu0 %v436
    %1443 = vmatpush1.msra.mxu0 %v435
    %1444 = vmatprep.subr.mxu0 %v438
    %1445 = vmatpush1.msra.mxu0 %v437
    %1446 = vmatprep.subr.mxu0 %v440
    %1447 = vmatpush1.msra.mxu0 %v439
    %1448 = vmatprep.subr.mxu0 %v442
    %1449 = vmatpush1.msra.mxu0 %v441
    %1450 = vmatprep.subr.mxu0 %v444
    %1451 = vmatpush1.msra.mxu0 %v443
    %1452 = vmatprep.subr.mxu0 %v446
    %1453 = vmatpush1.msra.mxu0 %v445
    %1454 = vmatprep.subr.mxu0 %v448
    %1455 = vmatpush1.msra.mxu0 %v447
    %1456 = vmatprep.subr.mxu0 %v450
    %1457 = vmatpush1.msra.mxu0 %v449
    %1458 = vmatprep.subr.mxu0 %v452
    %1459 = vmatpush1.msra.mxu0 %v451
    %1460 = vmatprep.subr.mxu0 %v454
    %1461 = vmatpush1.msra.mxu0 %v453
    %1462 = vmatprep.subr.mxu0 %v456
    %1463 = vmatpush1.msra.mxu0 %v455
    %1464 = vmatprep.subr.mxu0 %v458
    %1465 = vmatpush1.msra.mxu0 %v457
    %1466 = vmatprep.subr.mxu0 %v460
    %1467 = vmatpush1.msra.mxu0 %v459
    %1468 = vmatprep.subr.mxu0 %v462
    %1469 = vmatpush1.msra.mxu0 %v461
    %1470 = vmatprep.subr.mxu0 %v464
    %1471 = vmatpush1.msra.mxu0 %v463
    %1472 = vmatprep.subr.mxu0 %v466
    %1473 = vmatpush1.msra.mxu0 %v465
    %1474 = vmatprep.subr.mxu0 %v468
    %1475 = vmatpush1.msra.mxu0 %v467
    %1476 = vmatprep.subr.mxu0 %v470
    %1477 = vmatpush1.msra.mxu0 %v469
    %1478 = vmatprep.subr.mxu0 %v472
    %1479 = vmatpush1.msra.mxu0 %v471
    %1480 = vmatprep.subr.mxu0 %v474
    %1481 = vmatpush1.msra.mxu0 %v473
    %1482 = vmatprep.subr.mxu0 %v476
    %1483 = vmatpush1.msra.mxu0 %v475
    %1484 = vmatprep.subr.mxu0 %v478
    %1485 = vmatpush1.msra.mxu0 %v477
    %1486 = vmatprep.subr.mxu0 %v480
    %1487 = vmatpush1.msra.mxu0 %v479
    %1488 = vmatprep.subr.mxu0 %v482
    %1489 = vmatpush1.msra.mxu0 %v481
    %1490 = vmatprep.subr.mxu0 %v484
    %1491 = vmatpush1.msra.mxu0 %v483
    %1492 = vmatprep.subr.mxu0 %v486
    %1493 = vmatpush1.msra.mxu0 %v485
    %1494 = vmatprep.subr.mxu0 %v488
    %1495 = vmatpush1.msra.mxu0 %v487
    %1496 = vmatprep.subr.mxu0 %v490
    %1497 = vmatpush1.msra.mxu0 %v489
    %1498 = vmatprep.subr.mxu0 %v492
    %1499 = vmatpush1.msra.mxu0 %v491
    %1500 = vmatprep.subr.mxu0 %v494
    %1501 = vmatpush1.msra.mxu0 %v493
    %1502 = vmatprep.subr.mxu0 %v496
    %1503 = vmatpush1.msra.mxu0 %v495
    %1504 = vmatprep.mubr.f32.mxu0 %v94
    %1505 = vmatmul.mubr.f32.gmra.mrb[0].mxu0 %v93
    %v1506 = vpop.f32.mrb[0].mxu0
    %v1507 = vadd.f32 %v1436, %v1506
    %v1508 = vpop.f32.mrb[0].mxu0
    %v1509 = vadd.f32 %v1438, %v1508
    %1510 = vdwg.mxu0
    %1511 = vmatprep.subr.mxu0 %v498
    %1512 = vmatpush1.msra.mxu0 %v497
    %1513 = vmatprep.subr.mxu0 %v500
    %1514 = vmatpush1.msra.mxu0 %v499
    %1515 = vmatprep.subr.mxu0 %v502
    %1516 = vmatpush1.msra.mxu0 %v501
    %1517 = vmatprep.subr.mxu0 %v504
    %1518 = vmatpush1.msra.mxu0 %v503
    %1519 = vmatprep.subr.mxu0 %v506
    %1520 = vmatpush1.msra.mxu0 %v505
    %1521 = vmatprep.subr.mxu0 %v508
    %1522 = vmatpush1.msra.mxu0 %v507
    %1523 = vmatprep.subr.mxu0 %v510
    %1524 = vmatpush1.msra.mxu0 %v509
    %1525 = vmatprep.subr.mxu0 %v512
    %1526 = vmatpush1.msra.mxu0 %v511
    %1527 = vmatprep.subr.mxu0 %v514
    %1528 = vmatpush1.msra.mxu0 %v513
    %1529 = vmatprep.subr.mxu0 %v516
    %1530 = vmatpush1.msra.mxu0 %v515
    %1531 = vmatprep.subr.mxu0 %v518
    %1532 = vmatpush1.msra.mxu0 %v517
    %1533 = vmatprep.subr.mxu0 %v520
    %1534 = vmatpush1.msra.mxu0 %v519
    %1535 = vmatprep.subr.mxu0 %v522
    %1536 = vmatpush1.msra.mxu0 %v521
    %1537 = vmatprep.subr.mxu0 %v524
    %1538 = vmatpush1.msra.mxu0 %v523
    %1539 = vmatprep.subr.mxu0 %v526
    %1540 = vmatpush1.msra.mxu0 %v525
    %1541 = vmatprep.subr.mxu0 %v528
    %1542 = vmatpush1.msra.mxu0 %v527
    %1543 = vmatprep.subr.mxu0 %v530
    %1544 = vmatpush1.msra.mxu0 %v529
    %1545 = vmatprep.subr.mxu0 %v532
    %1546 = vmatpush1.msra.mxu0 %v531
    %1547 = vmatprep.subr.mxu0 %v534
    %1548 = vmatpush1.msra.mxu0 %v533
    %1549 = vmatprep.subr.mxu0 %v536
    %1550 = vmatpush1.msra.mxu0 %v535
    %1551 = vmatprep.subr.mxu0 %v538
    %1552 = vmatpush1.msra.mxu0 %v537
    %1553 = vmatprep.subr.mxu0 %v540
    %1554 = vmatpush1.msra.mxu0 %v539
    %1555 = vmatprep.subr.mxu0 %v542
    %1556 = vmatpush1.msra.mxu0 %v541
    %1557 = vmatprep.subr.mxu0 %v544
    %1558 = vmatpush1.msra.mxu0 %v543
    %1559 = vmatprep.subr.mxu0 %v546
    %1560 = vmatpush1.msra.mxu0 %v545
    %1561 = vmatprep.subr.mxu0 %v548
    %1562 = vmatpush1.msra.mxu0 %v547
    %1563 = vmatprep.subr.mxu0 %v550
    %1564 = vmatpush1.msra.mxu0 %v549
    %1565 = vmatprep.subr.mxu0 %v552
    %1566 = vmatpush1.msra.mxu0 %v551
    %1567 = vmatprep.subr.mxu0 %v554
    %1568 = vmatpush1.msra.mxu0 %v553
    %1569 = vmatprep.subr.mxu0 %v556
    %1570 = vmatpush1.msra.mxu0 %v555
    %1571 = vmatprep.subr.mxu0 %v558
    %1572 = vmatpush1.msra.mxu0 %v557
    %1573 = vmatprep.subr.mxu0 %v560
    %1574 = vmatpush1.msra.mxu0 %v559
    %1575 = vmatprep.mubr.f32.mxu0 %v96
    %1576 = vmatmul.mubr.f32.gmra.mrb[0].mxu0 %v95
    %v1577 = vpop.f32.mrb[0].mxu0
    %v1578 = vadd.f32 %v1507, %v1577
    %v1579 = vpop.f32.mrb[0].mxu0
    %v1580 = vadd.f32 %v1509, %v1579
    %1581 = vdwg.mxu0
    %1582 = vmatprep.subr.mxu0 %v562
    %1583 = vmatpush1.msra.mxu0 %v561
    %1584 = vmatprep.subr.mxu0 %v564
    %1585 = vmatpush1.msra.mxu0 %v563
    %1586 = vmatprep.subr.mxu0 %v566
    %1587 = vmatpush1.msra.mxu0 %v565
    %1588 = vmatprep.subr.mxu0 %v568
    %1589 = vmatpush1.msra.mxu0 %v567
    %1590 = vmatprep.subr.mxu0 %v570
    %1591 = vmatpush1.msra.mxu0 %v569
    %1592 = vmatprep.subr.mxu0 %v572
    %1593 = vmatpush1.msra.mxu0 %v571
    %1594 = vmatprep.subr.mxu0 %v574
    %1595 = vmatpush1.msra.mxu0 %v573
    %1596 = vmatprep.subr.mxu0 %v576
    %1597 = vmatpush1.msra.mxu0 %v575
    %1598 = vmatprep.subr.mxu0 %v578
    %1599 = vmatpush1.msra.mxu0 %v577
    %1600 = vmatprep.subr.mxu0 %v580
    %1601 = vmatpush1.msra.mxu0 %v579
    %1602 = vmatprep.subr.mxu0 %v582
    %1603 = vmatpush1.msra.mxu0 %v581
    %1604 = vmatprep.subr.mxu0 %v584
    %1605 = vmatpush1.msra.mxu0 %v583
    %1606 = vmatprep.subr.mxu0 %v586
    %1607 = vmatpush1.msra.mxu0 %v585
    %1608 = vmatprep.subr.mxu0 %v588
    %1609 = vmatpush1.msra.mxu0 %v587
    %1610 = vmatprep.subr.mxu0 %v590
    %1611 = vmatpush1.msra.mxu0 %v589
    %1612 = vmatprep.subr.mxu0 %v592
    %1613 = vmatpush1.msra.mxu0 %v591
    %1614 = vmatprep.subr.mxu0 %v594
    %1615 = vmatpush1.msra.mxu0 %v593
    %1616 = vmatprep.subr.mxu0 %v596
    %1617 = vmatpush1.msra.mxu0 %v595
    %1618 = vmatprep.subr.mxu0 %v598
    %1619 = vmatpush1.msra.mxu0 %v597
    %1620 = vmatprep.subr.mxu0 %v600
    %1621 = vmatpush1.msra.mxu0 %v599
    %1622 = vmatprep.subr.mxu0 %v602
    %1623 = vmatpush1.msra.mxu0 %v601
    %1624 = vmatprep.subr.mxu0 %v604
    %1625 = vmatpush1.msra.mxu0 %v603
    %1626 = vmatprep.subr.mxu0 %v606
    %1627 = vmatpush1.msra.mxu0 %v605
    %1628 = vmatprep.subr.mxu0 %v608
    %1629 = vmatpush1.msra.mxu0 %v607
    %1630 = vmatprep.subr.mxu0 %v610
    %1631 = vmatpush1.msra.mxu0 %v609
    %1632 = vmatprep.subr.mxu0 %v612
    %1633 = vmatpush1.msra.mxu0 %v611
    %1634 = vmatprep.subr.mxu0 %v614
    %1635 = vmatpush1.msra.mxu0 %v613
    %1636 = vmatprep.subr.mxu0 %v616
    %1637 = vmatpush1.msra.mxu0 %v615
    %1638 = vmatprep.subr.mxu0 %v618
    %1639 = vmatpush1.msra.mxu0 %v617
    %1640 = vmatprep.subr.mxu0 %v620
    %1641 = vmatpush1.msra.mxu0 %v619
    %1642 = vmatprep.subr.mxu0 %v622
    %1643 = vmatpush1.msra.mxu0 %v621
    %1644 = vmatprep.subr.mxu0 %v624
    %1645 = vmatpush1.msra.mxu0 %v623
    %1646 = vmatprep.mubr.f32.mxu0 %v98
    %1647 = vmatmul.mubr.f32.gmra.mrb[0].mxu0 %v97
    %v1648 = vpop.f32.mrb[0].mxu0
    %v1649 = vadd.f32 %v1578, %v1648
    %v1650 = vpop.f32.mrb[0].mxu0
    %v1651 = vadd.f32 %v1580, %v1650
    %1652 = vdwg.mxu0
    %1653 = vmatprep.subr.mxu0 %v626
    %1654 = vmatpush1.msra.mxu0 %v625
    %1655 = vmatprep.subr.mxu0 %v628
    %1656 = vmatpush1.msra.mxu0 %v627
    %1657 = vmatprep.subr.mxu0 %v630
    %1658 = vmatpush1.msra.mxu0 %v629
    %1659 = vmatprep.subr.mxu0 %v632
    %1660 = vmatpush1.msra.mxu0 %v631
    %1661 = vmatprep.subr.mxu0 %v634
    %1662 = vmatpush1.msra.mxu0 %v633
    %1663 = vmatprep.subr.mxu0 %v636
    %1664 = vmatpush1.msra.mxu0 %v635
    %1665 = vmatprep.subr.mxu0 %v638
    %1666 = vmatpush1.msra.mxu0 %v637
    %1667 = vmatprep.subr.mxu0 %v640
    %1668 = vmatpush1.msra.mxu0 %v639
    %1669 = vmatprep.subr.mxu0 %v642
    %1670 = vmatpush1.msra.mxu0 %v641
    %1671 = vmatprep.subr.mxu0 %v644
    %1672 = vmatpush1.msra.mxu0 %v643
    %1673 = vmatprep.subr.mxu0 %v646
    %1674 = vmatpush1.msra.mxu0 %v645
    %1675 = vmatprep.subr.mxu0 %v648
    %1676 = vmatpush1.msra.mxu0 %v647
    %1677 = vmatprep.subr.mxu0 %v650
    %1678 = vmatpush1.msra.mxu0 %v649
    %1679 = vmatprep.subr.mxu0 %v652
    %1680 = vmatpush1.msra.mxu0 %v651
    %1681 = vmatprep.subr.mxu0 %v654
    %1682 = vmatpush1.msra.mxu0 %v653
    %1683 = vmatprep.subr.mxu0 %v656
    %1684 = vmatpush1.msra.mxu0 %v655
    %1685 = vmatprep.subr.mxu0 %v658
    %1686 = vmatpush1.msra.mxu0 %v657
    %1687 = vmatprep.subr.mxu0 %v660
    %1688 = vmatpush1.msra.mxu0 %v659
    %1689 = vmatprep.subr.mxu0 %v662
    %1690 = vmatpush1.msra.mxu0 %v661
    %1691 = vmatprep.subr.mxu0 %v664
    %1692 = vmatpush1.msra.mxu0 %v663
    %1693 = vmatprep.subr.mxu0 %v666
    %1694 = vmatpush1.msra.mxu0 %v665
    %1695 = vmatprep.subr.mxu0 %v668
    %1696 = vmatpush1.msra.mxu0 %v667
    %1697 = vmatprep.subr.mxu0 %v670
    %1698 = vmatpush1.msra.mxu0 %v669
    %1699 = vmatprep.subr.mxu0 %v672
    %1700 = vmatpush1.msra.mxu0 %v671
    %1701 = vmatprep.subr.mxu0 %v674
    %1702 = vmatpush1.msra.mxu0 %v673
    %1703 = vmatprep.subr.mxu0 %v676
    %1704 = vmatpush1.msra.mxu0 %v675
    %1705 = vmatprep.subr.mxu0 %v678
    %1706 = vmatpush1.msra.mxu0 %v677
    %1707 = vmatprep.subr.mxu0 %v680
    %1708 = vmatpush1.msra.mxu0 %v679
    %1709 = vmatprep.subr.mxu0 %v682
    %1710 = vmatpush1.msra.mxu0 %v681
    %1711 = vmatprep.subr.mxu0 %v684
    %1712 = vmatpush1.msra.mxu0 %v683
    %1713 = vmatprep.subr.mxu0 %v686
    %1714 = vmatpush1.msra.mxu0 %v685
    %1715 = vmatprep.subr.mxu0 %v688
    %1716 = vmatpush1.msra.mxu0 %v687
    %1717 = vmatprep.mubr.f32.mxu0 %v100
    %1718 = vmatmul.mubr.f32.gmra.mrb[0].mxu0 %v99
    %v1719 = vpop.f32.mrb[0].mxu0
    %v1720 = vadd.f32 %v1649, %v1719
    %v1721 = vpop.f32.mrb[0].mxu0
    %v1722 = vadd.f32 %v1651, %v1721
    %1723 = vdwg.mxu0
    %1724 = vmatprep.subr.mxu0 %v690
    %1725 = vmatpush1.msra.mxu0 %v689
    %1726 = vmatprep.subr.mxu0 %v692
    %1727 = vmatpush1.msra.mxu0 %v691
    %1728 = vmatprep.subr.mxu0 %v694
    %1729 = vmatpush1.msra.mxu0 %v693
    %1730 = vmatprep.subr.mxu0 %v696
    %1731 = vmatpush1.msra.mxu0 %v695
    %1732 = vmatprep.subr.mxu0 %v698
    %1733 = vmatpush1.msra.mxu0 %v697
    %1734 = vmatprep.subr.mxu0 %v700
    %1735 = vmatpush1.msra.mxu0 %v699
    %1736 = vmatprep.subr.mxu0 %v702
    %1737 = vmatpush1.msra.mxu0 %v701
    %1738 = vmatprep.subr.mxu0 %v704
    %1739 = vmatpush1.msra.mxu0 %v703
    %1740 = vmatprep.subr.mxu0 %v706
    %1741 = vmatpush1.msra.mxu0 %v705
    %1742 = vmatprep.subr.mxu0 %v708
    %1743 = vmatpush1.msra.mxu0 %v707
    %1744 = vmatprep.subr.mxu0 %v710
    %1745 = vmatpush1.msra.mxu0 %v709
    %1746 = vmatprep.subr.mxu0 %v712
    %1747 = vmatpush1.msra.mxu0 %v711
    %1748 = vmatprep.subr.mxu0 %v714
    %1749 = vmatpush1.msra.mxu0 %v713
    %1750 = vmatprep.subr.mxu0 %v716
    %1751 = vmatpush1.msra.mxu0 %v715
    %1752 = vmatprep.subr.mxu0 %v718
    %1753 = vmatpush1.msra.mxu0 %v717
    %1754 = vmatprep.subr.mxu0 %v720
    %1755 = vmatpush1.msra.mxu0 %v719
    %1756 = vmatprep.subr.mxu0 %v722
    %1757 = vmatpush1.msra.mxu0 %v721
    %1758 = vmatprep.subr.mxu0 %v724
    %1759 = vmatpush1.msra.mxu0 %v723
    %1760 = vmatprep.subr.mxu0 %v726
    %1761 = vmatpush1.msra.mxu0 %v725
    %1762 = vmatprep.subr.mxu0 %v728
    %1763 = vmatpush1.msra.mxu0 %v727
    %1764 = vmatprep.subr.mxu0 %v730
    %1765 = vmatpush1.msra.mxu0 %v729
    %1766 = vmatprep.subr.mxu0 %v732
    %1767 = vmatpush1.msra.mxu0 %v731
    %1768 = vmatprep.subr.mxu0 %v734
    %1769 = vmatpush1.msra.mxu0 %v733
    %1770 = vmatprep.subr.mxu0 %v736
    %1771 = vmatpush1.msra.mxu0 %v735
    %1772 = vmatprep.subr.mxu0 %v738
    %1773 = vmatpush1.msra.mxu0 %v737
    %1774 = vmatprep.subr.mxu0 %v740
    %1775 = vmatpush1.msra.mxu0 %v739
    %1776 = vmatprep.subr.mxu0 %v742
    %1777 = vmatpush1.msra.mxu0 %v741
    %1778 = vmatprep.subr.mxu0 %v744
    %1779 = vmatpush1.msra.mxu0 %v743
    %1780 = vmatprep.subr.mxu0 %v746
    %1781 = vmatpush1.msra.mxu0 %v745
    %1782 = vmatprep.subr.mxu0 %v748
    %1783 = vmatpush1.msra.mxu0 %v747
    %1784 = vmatprep.subr.mxu0 %v750
    %1785 = vmatpush1.msra.mxu0 %v749
    %1786 = vmatprep.subr.mxu0 %v752
    %1787 = vmatpush1.msra.mxu0 %v751
    %1788 = vmatprep.mubr.f32.mxu0 %v102
    %1789 = vmatmul.mubr.f32.gmra.mrb[0].mxu0 %v101
    %v1790 = vpop.f32.mrb[0].mxu0
    %v1791 = vadd.f32 %v1720, %v1790
    %v1792 = vpop.f32.mrb[0].mxu0
    %v1793 = vadd.f32 %v1722, %v1792
    %1794 = vdwg.mxu0
    %1795 = vmatprep.subr.mxu0 %v754
    %1796 = vmatpush1.msra.mxu0 %v753
    %1797 = vmatprep.subr.mxu0 %v756
    %1798 = vmatpush1.msra.mxu0 %v755
    %1799 = vmatprep.subr.mxu0 %v758
    %1800 = vmatpush1.msra.mxu0 %v757
    %1801 = vmatprep.subr.mxu0 %v760
    %1802 = vmatpush1.msra.mxu0 %v759
    %1803 = vmatprep.subr.mxu0 %v762
    %1804 = vmatpush1.msra.mxu0 %v761
    %1805 = vmatprep.subr.mxu0 %v764
    %1806 = vmatpush1.msra.mxu0 %v763
    %1807 = vmatprep.subr.mxu0 %v766
    %1808 = vmatpush1.msra.mxu0 %v765
    %1809 = vmatprep.subr.mxu0 %v768
    %1810 = vmatpush1.msra.mxu0 %v767
    %1811 = vmatprep.subr.mxu0 %v770
    %1812 = vmatpush1.msra.mxu0 %v769
    %1813 = vmatprep.subr.mxu0 %v772
    %1814 = vmatpush1.msra.mxu0 %v771
    %1815 = vmatprep.subr.mxu0 %v774
    %1816 = vmatpush1.msra.mxu0 %v773
    %1817 = vmatprep.subr.mxu0 %v776
    %1818 = vmatpush1.msra.mxu0 %v775
    %1819 = vmatprep.subr.mxu0 %v778
    %1820 = vmatpush1.msra.mxu0 %v777
    %1821 = vmatprep.subr.mxu0 %v780
    %1822 = vmatpush1.msra.mxu0 %v779
    %1823 = vmatprep.subr.mxu0 %v782
    %1824 = vmatpush1.msra.mxu0 %v781
    %1825 = vmatprep.subr.mxu0 %v784
    %1826 = vmatpush1.msra.mxu0 %v783
    %1827 = vmatprep.subr.mxu0 %v786
    %1828 = vmatpush1.msra.mxu0 %v785
    %1829 = vmatprep.subr.mxu0 %v788
    %1830 = vmatpush1.msra.mxu0 %v787
    %1831 = vmatprep.subr.mxu0 %v790
    %1832 = vmatpush1.msra.mxu0 %v789
    %1833 = vmatprep.subr.mxu0 %v792
    %1834 = vmatpush1.msra.mxu0 %v791
    %1835 = vmatprep.subr.mxu0 %v794
    %1836 = vmatpush1.msra.mxu0 %v793
    %1837 = vmatprep.subr.mxu0 %v796
    %1838 = vmatpush1.msra.mxu0 %v795
    %1839 = vmatprep.subr.mxu0 %v798
    %1840 = vmatpush1.msra.mxu0 %v797
    %1841 = vmatprep.subr.mxu0 %v800
    %1842 = vmatpush1.msra.mxu0 %v799
    %1843 = vmatprep.subr.mxu0 %v802
    %1844 = vmatpush1.msra.mxu0 %v801
    %1845 = vmatprep.subr.mxu0 %v804
    %1846 = vmatpush1.msra.mxu0 %v803
    %1847 = vmatprep.subr.mxu0 %v806
    %1848 = vmatpush1.msra.mxu0 %v805
    %1849 = vmatprep.subr.mxu0 %v808
    %1850 = vmatpush1.msra.mxu0 %v807
    %1851 = vmatprep.subr.mxu0 %v810
    %1852 = vmatpush1.msra.mxu0 %v809
    %1853 = vmatprep.subr.mxu0 %v812
    %1854 = vmatpush1.msra.mxu0 %v811
    %1855 = vmatprep.subr.mxu0 %v814
    %1856 = vmatpush1.msra.mxu0 %v813
    %1857 = vmatprep.subr.mxu0 %v816
    %1858 = vmatpush1.msra.mxu0 %v815
    %1859 = vmatprep.mubr.f32.mxu0 %v104
    %1860 = vmatmul.mubr.f32.gmra.mrb[0].mxu0 %v103
    %v1861 = vpop.f32.mrb[0].mxu0
    %v1862 = vadd.f32 %v1791, %v1861
    %v1863 = vpop.f32.mrb[0].mxu0
    %v1864 = vadd.f32 %v1793, %v1863
    %1865 = vdwg.mxu0
    %1866 = vmatprep.subr.mxu0 %v818
    %1867 = vmatpush1.msra.mxu0 %v817
    %1868 = vmatprep.subr.mxu0 %v820
    %1869 = vmatpush1.msra.mxu0 %v819
    %1870 = vmatprep.subr.mxu0 %v822
    %1871 = vmatpush1.msra.mxu0 %v821
    %1872 = vmatprep.subr.mxu0 %v824
    %1873 = vmatpush1.msra.mxu0 %v823
    %1874 = vmatprep.subr.mxu0 %v826
    %1875 = vmatpush1.msra.mxu0 %v825
    %1876 = vmatprep.subr.mxu0 %v828
    %1877 = vmatpush1.msra.mxu0 %v827
    %1878 = vmatprep.subr.mxu0 %v830
    %1879 = vmatpush1.msra.mxu0 %v829
    %1880 = vmatprep.subr.mxu0 %v832
    %1881 = vmatpush1.msra.mxu0 %v831
    %1882 = vmatprep.subr.mxu0 %v834
    %1883 = vmatpush1.msra.mxu0 %v833
    %1884 = vmatprep.subr.mxu0 %v836
    %1885 = vmatpush1.msra.mxu0 %v835
    %1886 = vmatprep.subr.mxu0 %v838
    %1887 = vmatpush1.msra.mxu0 %v837
    %1888 = vmatprep.subr.mxu0 %v840
    %1889 = vmatpush1.msra.mxu0 %v839
    %1890 = vmatprep.subr.mxu0 %v842
    %1891 = vmatpush1.msra.mxu0 %v841
    %1892 = vmatprep.subr.mxu0 %v844
    %1893 = vmatpush1.msra.mxu0 %v843
    %1894 = vmatprep.subr.mxu0 %v846
    %1895 = vmatpush1.msra.mxu0 %v845
    %1896 = vmatprep.subr.mxu0 %v848
    %1897 = vmatpush1.msra.mxu0 %v847
    %1898 = vmatprep.subr.mxu0 %v850
    %1899 = vmatpush1.msra.mxu0 %v849
    %1900 = vmatprep.subr.mxu0 %v852
    %1901 = vmatpush1.msra.mxu0 %v851
    %1902 = vmatprep.subr.mxu0 %v854
    %1903 = vmatpush1.msra.mxu0 %v853
    %1904 = vmatprep.subr.mxu0 %v856
    %1905 = vmatpush1.msra.mxu0 %v855
    %1906 = vmatprep.subr.mxu0 %v858
    %1907 = vmatpush1.msra.mxu0 %v857
    %1908 = vmatprep.subr.mxu0 %v860
    %1909 = vmatpush1.msra.mxu0 %v859
    %1910 = vmatprep.subr.mxu0 %v862
    %1911 = vmatpush1.msra.mxu0 %v861
    %1912 = vmatprep.subr.mxu0 %v864
    %1913 = vmatpush1.msra.mxu0 %v863
    %1914 = vmatprep.subr.mxu0 %v866
    %1915 = vmatpush1.msra.mxu0 %v865
    %1916 = vmatprep.subr.mxu0 %v868
    %1917 = vmatpush1.msra.mxu0 %v867
    %1918 = vmatprep.subr.mxu0 %v870
    %1919 = vmatpush1.msra.mxu0 %v869
    %1920 = vmatprep.subr.mxu0 %v872
    %1921 = vmatpush1.msra.mxu0 %v871
    %1922 = vmatprep.subr.mxu0 %v874
    %1923 = vmatpush1.msra.mxu0 %v873
    %1924 = vmatprep.subr.mxu0 %v876
    %1925 = vmatpush1.msra.mxu0 %v875
    %1926 = vmatprep.subr.mxu0 %v878
    %1927 = vmatpush1.msra.mxu0 %v877
    %1928 = vmatprep.subr.mxu0 %v880
    %1929 = vmatpush1.msra.mxu0 %v879
    %1930 = vmatprep.mubr.f32.mxu0 %v106
    %1931 = vmatmul.mubr.f32.gmra.mrb[0].mxu0 %v105
    %v1932 = vpop.f32.mrb[0].mxu0
    %v1933 = vadd.f32 %v1862, %v1932
    %v1934 = vpop.f32.mrb[0].mxu0
    %v1935 = vadd.f32 %v1864, %v1934
    %1936 = vdwg.mxu0
    %1937 = vmatprep.subr.mxu0 %v882
    %1938 = vmatpush1.msra.mxu0 %v881
    %1939 = vmatprep.subr.mxu0 %v884
    %1940 = vmatpush1.msra.mxu0 %v883
    %1941 = vmatprep.subr.mxu0 %v886
    %1942 = vmatpush1.msra.mxu0 %v885
    %1943 = vmatprep.subr.mxu0 %v888
    %1944 = vmatpush1.msra.mxu0 %v887
    %1945 = vmatprep.subr.mxu0 %v890
    %1946 = vmatpush1.msra.mxu0 %v889
    %1947 = vmatprep.subr.mxu0 %v892
    %1948 = vmatpush1.msra.mxu0 %v891
    %1949 = vmatprep.subr.mxu0 %v894
    %1950 = vmatpush1.msra.mxu0 %v893
    %1951 = vmatprep.subr.mxu0 %v896
    %1952 = vmatpush1.msra.mxu0 %v895
    %1953 = vmatprep.subr.mxu0 %v898
    %1954 = vmatpush1.msra.mxu0 %v897
    %1955 = vmatprep.subr.mxu0 %v900
    %1956 = vmatpush1.msra.mxu0 %v899
    %1957 = vmatprep.subr.mxu0 %v902
    %1958 = vmatpush1.msra.mxu0 %v901
    %1959 = vmatprep.subr.mxu0 %v904
    %1960 = vmatpush1.msra.mxu0 %v903
    %1961 = vmatprep.subr.mxu0 %v906
    %1962 = vmatpush1.msra.mxu0 %v905
    %1963 = vmatprep.subr.mxu0 %v908
    %1964 = vmatpush1.msra.mxu0 %v907
    %1965 = vmatprep.subr.mxu0 %v910
    %1966 = vmatpush1.msra.mxu0 %v909
    %1967 = vmatprep.subr.mxu0 %v912
    %1968 = vmatpush1.msra.mxu0 %v911
    %1969 = vmatprep.subr.mxu0 %v914
    %1970 = vmatpush1.msra.mxu0 %v913
    %1971 = vmatprep.subr.mxu0 %v916
    %1972 = vmatpush1.msra.mxu0 %v915
    %1973 = vmatprep.subr.mxu0 %v918
    %1974 = vmatpush1.msra.mxu0 %v917
    %1975 = vmatprep.subr.mxu0 %v920
    %1976 = vmatpush1.msra.mxu0 %v919
    %1977 = vmatprep.subr.mxu0 %v922
    %1978 = vmatpush1.msra.mxu0 %v921
    %1979 = vmatprep.subr.mxu0 %v924
    %1980 = vmatpush1.msra.mxu0 %v923
    %1981 = vmatprep.subr.mxu0 %v926
    %1982 = vmatpush1.msra.mxu0 %v925
    %1983 = vmatprep.subr.mxu0 %v928
    %1984 = vmatpush1.msra.mxu0 %v927
    %1985 = vmatprep.subr.mxu0 %v930
    %1986 = vmatpush1.msra.mxu0 %v929
    %1987 = vmatprep.subr.mxu0 %v932
    %1988 = vmatpush1.msra.mxu0 %v931
    %1989 = vmatprep.subr.mxu0 %v934
    %1990 = vmatpush1.msra.mxu0 %v933
    %1991 = vmatprep.subr.mxu0 %v936
    %1992 = vmatpush1.msra.mxu0 %v935
    %1993 = vmatprep.subr.mxu0 %v938
    %1994 = vmatpush1.msra.mxu0 %v937
    %1995 = vmatprep.subr.mxu0 %v940
    %1996 = vmatpush1.msra.mxu0 %v939
    %1997 = vmatprep.subr.mxu0 %v942
    %1998 = vmatpush1.msra.mxu0 %v941
    %1999 = vmatprep.subr.mxu0 %v944
    %2000 = vmatpush1.msra.mxu0 %v943
    %2001 = vmatprep.mubr.f32.mxu0 %v108
    %2002 = vmatmul.mubr.f32.gmra.mrb[0].mxu0 %v107
    %v2003 = vpop.f32.mrb[0].mxu0
    %v2004 = vadd.f32 %v1933, %v2003
    %v2005 = vpop.f32.mrb[0].mxu0
    %v2006 = vadd.f32 %v1935, %v2005
    %2007 = vdwg.mxu0
    %2008 = vmatprep.subr.mxu0 %v946
    %2009 = vmatpush1.msra.mxu0 %v945
    %2010 = vmatprep.subr.mxu0 %v948
    %2011 = vmatpush1.msra.mxu0 %v947
    %2012 = vmatprep.subr.mxu0 %v950
    %2013 = vmatpush1.msra.mxu0 %v949
    %2014 = vmatprep.subr.mxu0 %v952
    %2015 = vmatpush1.msra.mxu0 %v951
    %2016 = vmatprep.subr.mxu0 %v954
    %2017 = vmatpush1.msra.mxu0 %v953
    %2018 = vmatprep.subr.mxu0 %v956
    %2019 = vmatpush1.msra.mxu0 %v955
    %2020 = vmatprep.subr.mxu0 %v958
    %2021 = vmatpush1.msra.mxu0 %v957
    %2022 = vmatprep.subr.mxu0 %v960
    %2023 = vmatpush1.msra.mxu0 %v959
    %2024 = vmatprep.subr.mxu0 %v962
    %2025 = vmatpush1.msra.mxu0 %v961
    %2026 = vmatprep.subr.mxu0 %v964
    %2027 = vmatpush1.msra.mxu0 %v963
    %2028 = vmatprep.subr.mxu0 %v966
    %2029 = vmatpush1.msra.mxu0 %v965
    %2030 = vmatprep.subr.mxu0 %v968
    %2031 = vmatpush1.msra.mxu0 %v967
    %2032 = vmatprep.subr.mxu0 %v970
    %2033 = vmatpush1.msra.mxu0 %v969
    %2034 = vmatprep.subr.mxu0 %v972
    %2035 = vmatpush1.msra.mxu0 %v971
    %2036 = vmatprep.subr.mxu0 %v974
    %2037 = vmatpush1.msra.mxu0 %v973
    %2038 = vmatprep.subr.mxu0 %v976
    %2039 = vmatpush1.msra.mxu0 %v975
    %2040 = vmatprep.subr.mxu0 %v978
    %2041 = vmatpush1.msra.mxu0 %v977
    %2042 = vmatprep.subr.mxu0 %v980
    %2043 = vmatpush1.msra.mxu0 %v979
    %2044 = vmatprep.subr.mxu0 %v982
    %2045 = vmatpush1.msra.mxu0 %v981
    %2046 = vmatprep.subr.mxu0 %v984
    %2047 = vmatpush1.msra.mxu0 %v983
    %2048 = vmatprep.subr.mxu0 %v986
    %2049 = vmatpush1.msra.mxu0 %v985
    %2050 = vmatprep.subr.mxu0 %v988
    %2051 = vmatpush1.msra.mxu0 %v987
    %2052 = vmatprep.subr.mxu0 %v990
    %2053 = vmatpush1.msra.mxu0 %v989
    %2054 = vmatprep.subr.mxu0 %v992
    %2055 = vmatpush1.msra.mxu0 %v991
    %2056 = vmatprep.subr.mxu0 %v994
    %2057 = vmatpush1.msra.mxu0 %v993
    %2058 = vmatprep.subr.mxu0 %v996
    %2059 = vmatpush1.msra.mxu0 %v995
    %2060 = vmatprep.subr.mxu0 %v998
    %2061 = vmatpush1.msra.mxu0 %v997
    %2062 = vmatprep.subr.mxu0 %v1000
    %2063 = vmatpush1.msra.mxu0 %v999
    %2064 = vmatprep.subr.mxu0 %v1002
    %2065 = vmatpush1.msra.mxu0 %v1001
    %2066 = vmatprep.subr.mxu0 %v1004
    %2067 = vmatpush1.msra.mxu0 %v1003
    %2068 = vmatprep.subr.mxu0 %v1006
    %2069 = vmatpush1.msra.mxu0 %v1005
    %2070 = vmatprep.subr.mxu0 %v1008
    %2071 = vmatpush1.msra.mxu0 %v1007
    %2072 = vmatprep.mubr.f32.mxu0 %v110
    %2073 = vmatmul.mubr.f32.gmra.mrb[0].mxu0 %v109
    %v2074 = vpop.f32.mrb[0].mxu0
    %v2075 = vadd.f32 %v2004, %v2074
    %v2076 = vpop.f32.mrb[0].mxu0
    %v2077 = vadd.f32 %v2006, %v2076
    %2078 = vdwg.mxu0
    %2079 = vmatprep.subr.mxu0 %v1010
    %2080 = vmatpush1.msra.mxu0 %v1009
    %2081 = vmatprep.subr.mxu0 %v1012
    %2082 = vmatpush1.msra.mxu0 %v1011
    %2083 = vmatprep.subr.mxu0 %v1014
    %2084 = vmatpush1.msra.mxu0 %v1013
    %2085 = vmatprep.subr.mxu0 %v1016
    %2086 = vmatpush1.msra.mxu0 %v1015
    %2087 = vmatprep.subr.mxu0 %v1018
    %2088 = vmatpush1.msra.mxu0 %v1017
    %2089 = vmatprep.subr.mxu0 %v1020
    %2090 = vmatpush1.msra.mxu0 %v1019
    %2091 = vmatprep.subr.mxu0 %v1022
    %2092 = vmatpush1.msra.mxu0 %v1021
    %2093 = vmatprep.subr.mxu0 %v1024
    %2094 = vmatpush1.msra.mxu0 %v1023
    %2095 = vmatprep.subr.mxu0 %v1026
    %2096 = vmatpush1.msra.mxu0 %v1025
    %2097 = vmatprep.subr.mxu0 %v1028
    %2098 = vmatpush1.msra.mxu0 %v1027
    %2099 = vmatprep.subr.mxu0 %v1030
    %2100 = vmatpush1.msra.mxu0 %v1029
    %2101 = vmatprep.subr.mxu0 %v1032
    %2102 = vmatpush1.msra.mxu0 %v1031
    %2103 = vmatprep.subr.mxu0 %v1034
    %2104 = vmatpush1.msra.mxu0 %v1033
    %2105 = vmatprep.subr.mxu0 %v1036
    %2106 = vmatpush1.msra.mxu0 %v1035
    %2107 = vmatprep.subr.mxu0 %v1038
    %2108 = vmatpush1.msra.mxu0 %v1037
    %2109 = vmatprep.subr.mxu0 %v1040
    %2110 = vmatpush1.msra.mxu0 %v1039
    %2111 = vmatprep.subr.mxu0 %v1042
    %2112 = vmatpush1.msra.mxu0 %v1041
    %2113 = vmatprep.subr.mxu0 %v1044
    %2114 = vmatpush1.msra.mxu0 %v1043
    %2115 = vmatprep.subr.mxu0 %v1046
    %2116 = vmatpush1.msra.mxu0 %v1045
    %2117 = vmatprep.subr.mxu0 %v1048
    %2118 = vmatpush1.msra.mxu0 %v1047
    %2119 = vmatprep.subr.mxu0 %v1050
    %2120 = vmatpush1.msra.mxu0 %v1049
    %2121 = vmatprep.subr.mxu0 %v1052
    %2122 = vmatpush1.msra.mxu0 %v1051
    %2123 = vmatprep.subr.mxu0 %v1054
    %2124 = vmatpush1.msra.mxu0 %v1053
    %2125 = vmatprep.subr.mxu0 %v1056
    %2126 = vmatpush1.msra.mxu0 %v1055
    %2127 = vmatprep.subr.mxu0 %v1058
    %2128 = vmatpush1.msra.mxu0 %v1057
    %2129 = vmatprep.subr.mxu0 %v1060
    %2130 = vmatpush1.msra.mxu0 %v1059
    %2131 = vmatprep.subr.mxu0 %v1062
    %2132 = vmatpush1.msra.mxu0 %v1061
    %2133 = vmatprep.subr.mxu0 %v1064
    %2134 = vmatpush1.msra.mxu0 %v1063
    %2135 = vmatprep.subr.mxu0 %v1066
    %2136 = vmatpush1.msra.mxu0 %v1065
    %2137 = vmatprep.subr.mxu0 %v1068
    %2138 = vmatpush1.msra.mxu0 %v1067
    %2139 = vmatprep.subr.mxu0 %v1070
    %2140 = vmatpush1.msra.mxu0 %v1069
    %2141 = vmatprep.subr.mxu0 %v1072
    %2142 = vmatpush1.msra.mxu0 %v1071
    %2143 = vmatprep.mubr.f32.mxu0 %v112
    %2144 = vmatmul.mubr.f32.gmra.mrb[0].mxu0 %v111
    %v2145 = vpop.f32.mrb[0].mxu0
    %v2146 = vadd.f32 %v2075, %v2145
    %v2147 = vpop.f32.mrb[0].mxu0
    %v2148 = vadd.f32 %v2077, %v2147
    %2149 = vdwg.mxu0
    %v2150 = vmul.f32 %v2146, 0.5
    %v2151 = vmul.f32 %v2148, 0.5
    %v2152 = vmul.f32 %v2146, 0.70710677
    %v2153 = vmul.f32 %v2148, 0.70710677
    %vm2154 = vcmp.ge.f32.partialorder %v2152, 0.0
    %vm2155 = vcmp.ge.f32.partialorder %v2153, 0.0
    %v2156 = vsel %vm2154, 1.0, -1.0
    %v2157 = vsel %vm2155, 1.0, -1.0
    %v2158 = vand.u32 2147483647, %v2152
    %v2159 = vand.u32 2147483647, %v2153
    %v2160 = vmul.f32 %v2158, 0.3275911
    %v2161 = vmul.f32 %v2159, 0.3275911
    %v2162 = vadd.f32 %v2160, 1.0
    %v2163 = vadd.f32 %v2161, 1.0
    %v2164 = vrcp.pop %v2162
    %v2165 = vmul.f32 1.0, %v2164
    %v2166 = vrcp.pop %v2163
    %v2167 = vmul.f32 1.0, %v2166
    %v2168 = vmul.f32 %v2165, 1.0614054
    %v2169 = vmul.f32 %v2167, 1.0614054
    %v2170 = vadd.f32 %v2168, -1.4531521
    %v2171 = vadd.f32 %v2169, -1.4531521
    %v2172 = vmul.f32 %v2170, %v2165
    %v2173 = vmul.f32 %v2171, %v2167
    %v2174 = vadd.f32 %v2172, 1.4214138
    %v2175 = vadd.f32 %v2173, 1.4214138
    %v2176 = vmul.f32 %v2174, %v2165
    %v2177 = vmul.f32 %v2175, %v2167
    %v2178 = vadd.f32 %v2176, -0.28449672
    %v2179 = vadd.f32 %v2177, -0.28449672
    %v2180 = vmul.f32 %v2178, %v2165
    %v2181 = vmul.f32 %v2179, %v2167
    %v2182 = vadd.f32 %v2180, 0.2548296
    %v2183 = vadd.f32 %v2181, 0.2548296
    %v2184 = vmul.f32 %v2182, %v2165
    %v2185 = vmul.f32 %v2183, %v2167
    %v2186 = vsub.f32 0.0, %v2158
    %v2187 = vsub.f32 0.0, %v2159
    %v2188 = vmul.f32 %v2186, %v2158
    %v2189 = vmul.f32 %v2187, %v2159
    %v2190 = vmul.f32 %v2188, 1.442695
    %v2191 = vpow.pop %v2190
    %v2192 = vmul.f32 %v2189, 1.442695
    %v2193 = vpow.pop %v2192
    %v2194 = vmul.f32 %v2184, %v2191
    %v2195 = vmul.f32 %v2185, %v2193
    %v2196 = vsub.f32 1.0, %v2194
    %v2197 = vsub.f32 1.0, %v2195
    %v2198 = vmul.f32 %v2156, %v2196
    %v2199 = vmul.f32 %v2157, %v2197
    %v2200 = vadd.f32 %v2198, 1.0
    %v2201 = vadd.f32 %v2199, 1.0
    %v2202 = vmul.f32 %v2150, %v2200
    %v2203 = vmul.f32 %v2151, %v2201
    %v2204 = vld [vmem:[#allocation8] sm:$0xff]
    %v2205 = vld [vmem:[#allocation8 + $0x8] sm:$0xff]
    %v2206 = vld [vmem:[#allocation8 + $0x10] sm:$0xff]
    %v2207 = vld [vmem:[#allocation8 + $0x18] sm:$0xff]
    %v2208 = vld [vmem:[#allocation8 + $0x20] sm:$0xff]
    %v2209 = vld [vmem:[#allocation8 + $0x28] sm:$0xff]
    %v2210 = vld [vmem:[#allocation8 + $0x30] sm:$0xff]
    %v2211 = vld [vmem:[#allocation8 + $0x38] sm:$0xff]
    %v2212 = vld [vmem:[#allocation8 + $0x40] sm:$0xff]
    %v2213 = vld [vmem:[#allocation8 + $0x48] sm:$0xff]
    %v2214 = vld [vmem:[#allocation8 + $0x50] sm:$0xff]
    %v2215 = vld [vmem:[#allocation8 + $0x58] sm:$0xff]
    %v2216 = vld [vmem:[#allocation8 + $0x60] sm:$0xff]
    %v2217 = vld [vmem:[#allocation8 + $0x68] sm:$0xff]
    %v2218 = vld [vmem:[#allocation8 + $0x70] sm:$0xff]
    %v2219 = vld [vmem:[#allocation8 + $0x78] sm:$0xff]
    %v2220 = vld [vmem:[#allocation8 + $0x80] sm:$0xff]
    %v2221 = vld [vmem:[#allocation8 + $0x88] sm:$0xff]
    %v2222 = vld [vmem:[#allocation8 + $0x90] sm:$0xff]
    %v2223 = vld [vmem:[#allocation8 + $0x98] sm:$0xff]
    %v2224 = vld [vmem:[#allocation8 + $0xa0] sm:$0xff]
    %v2225 = vld [vmem:[#allocation8 + $0xa8] sm:$0xff]
    %v2226 = vld [vmem:[#allocation8 + $0xb0] sm:$0xff]
    %v2227 = vld [vmem:[#allocation8 + $0xb8] sm:$0xff]
    %v2228 = vld [vmem:[#allocation8 + $0xc0] sm:$0xff]
    %v2229 = vld [vmem:[#allocation8 + $0xc8] sm:$0xff]
    %v2230 = vld [vmem:[#allocation8 + $0xd0] sm:$0xff]
    %v2231 = vld [vmem:[#allocation8 + $0xd8] sm:$0xff]
    %v2232 = vld [vmem:[#allocation8 + $0xe0] sm:$0xff]
    %v2233 = vld [vmem:[#allocation8 + $0xe8] sm:$0xff]
    %v2234 = vld [vmem:[#allocation8 + $0xf0] sm:$0xff]
    %v2235 = vld [vmem:[#allocation8 + $0xf8] sm:$0xff]
    %v2236 = vld [vmem:[#allocation10] sm:$0x1]
    %v2238 = vlaneseq
    %v2239 = vshrl.u32 %v2238, 7
    %v2240 = vsub.s32 0, %v2239
    %v2241 = vrot.slane %v2236, %v2240
    %2243 = vmatprep.subr.mxu0 0.0
    %2244 = vmatpush1.msra.mxu0 %v2204
    %2245 = vmatprep.subr.mxu0 0.0
    %2246 = vmatpush1.msra.mxu0 %v2205
    %2247 = vmatprep.subr.mxu0 0.0
    %2248 = vmatpush1.msra.mxu0 %v2206
    %2249 = vmatprep.subr.mxu0 0.0
    %2250 = vmatpush1.msra.mxu0 %v2207
    %2251 = vmatprep.subr.mxu0 0.0
    %2252 = vmatpush1.msra.mxu0 %v2208
    %2253 = vmatprep.subr.mxu0 0.0
    %2254 = vmatpush1.msra.mxu0 %v2209
    %2255 = vmatprep.subr.mxu0 0.0
    %2256 = vmatpush1.msra.mxu0 %v2210
    %2257 = vmatprep.subr.mxu0 0.0
    %2258 = vmatpush1.msra.mxu0 %v2211
    %2259 = vmatprep.subr.mxu0 0.0
    %2260 = vmatpush1.msra.mxu0 %v2212
    %2261 = vmatprep.subr.mxu0 0.0
    %2262 = vmatpush1.msra.mxu0 %v2213
    %2263 = vmatprep.subr.mxu0 0.0
    %2264 = vmatpush1.msra.mxu0 %v2214
    %2265 = vmatprep.subr.mxu0 0.0
    %2266 = vmatpush1.msra.mxu0 %v2215
    %2267 = vmatprep.subr.mxu0 0.0
    %2268 = vmatpush1.msra.mxu0 %v2216
    %2269 = vmatprep.subr.mxu0 0.0
    %2270 = vmatpush1.msra.mxu0 %v2217
    %2271 = vmatprep.subr.mxu0 0.0
    %2272 = vmatpush1.msra.mxu0 %v2218
    %2273 = vmatprep.subr.mxu0 0.0
    %2274 = vmatpush1.msra.mxu0 %v2219
    %2275 = vmatprep.subr.mxu0 0.0
    %2276 = vmatpush1.msra.mxu0 %v2220
    %2277 = vmatprep.subr.mxu0 0.0
    %2278 = vmatpush1.msra.mxu0 %v2221
    %2279 = vmatprep.subr.mxu0 0.0
    %2280 = vmatpush1.msra.mxu0 %v2222
    %2281 = vmatprep.subr.mxu0 0.0
    %2282 = vmatpush1.msra.mxu0 %v2223
    %2283 = vmatprep.subr.mxu0 0.0
    %2284 = vmatpush1.msra.mxu0 %v2224
    %2285 = vmatprep.subr.mxu0 0.0
    %2286 = vmatpush1.msra.mxu0 %v2225
    %2287 = vmatprep.subr.mxu0 0.0
    %2288 = vmatpush1.msra.mxu0 %v2226
    %2289 = vmatprep.subr.mxu0 0.0
    %2290 = vmatpush1.msra.mxu0 %v2227
    %2291 = vmatprep.subr.mxu0 0.0
    %2292 = vmatpush1.msra.mxu0 %v2228
    %2293 = vmatprep.subr.mxu0 0.0
    %2294 = vmatpush1.msra.mxu0 %v2229
    %2295 = vmatprep.subr.mxu0 0.0
    %2296 = vmatpush1.msra.mxu0 %v2230
    %2297 = vmatprep.subr.mxu0 0.0
    %2298 = vmatpush1.msra.mxu0 %v2231
    %2299 = vmatprep.subr.mxu0 0.0
    %2300 = vmatpush1.msra.mxu0 %v2232
    %2301 = vmatprep.subr.mxu0 0.0
    %2302 = vmatpush1.msra.mxu0 %v2233
    %2303 = vmatprep.subr.mxu0 0.0
    %2304 = vmatpush1.msra.mxu0 %v2234
    %2305 = vmatprep.subr.mxu0 0.0
    %2306 = vmatpush1.msra.mxu0 %v2235
    %2307 = vmatprep.mubr.f32.mxu0 %v2203
    %2308 = vmatmul.mubr.f32.gmra.mrb[0].mxu0 %v2202
    %v2309 = vpop.f32.mrb[0].mxu0
    %v2310 = vadd.f32 %v2241, %v2309
    %v2311 = vpop.f32.mrb[0].mxu0
    %2312 = vdwg.mxu0
    %2313 = vst [vmem:[#allocation11] sm:$0xff] %v2310
    // Predicated region
    $region42: #{tpu_custom_call.1} parent=1 // pred_check
      _
    $region43: #{tpu_custom_call.1} parent=1 // pred_check_branch
      %2315 = sbr.rel (0) target = $region45
    $region44: #{tpu_custom_call.1} parent=1 // pred_region
      %s2317 = ssub.s32 128, 128
      %2318 = vsyncadd [#allocation4], %s2317
      %s2320 = sshll.u32 [#allocation11], 4
      %s2321 = int_to_ptr.vmem [resolvable:$true] %s2320
      %2323 = dma.vmem_to_hbm [thread:$0]  %s2321, 128, %s5, [#allocation4]
    $region45: #{tpu_custom_call.1} parent=1 // pred_fallthru
      _
    // Predicated region
    $region46: #{tpu_custom_call.1} parent=1 // pred_check
      _
    $region47: #{tpu_custom_call.1} parent=1 // pred_check_branch
      %2325 = sbr.rel (0) target = $region49
    $region48: #{tpu_custom_call.1} parent=1 // pred_region
      %2326 = dma.done [#allocation4], 128
    $region49: #{tpu_custom_call.1} parent=1 // pred_fallthru
      _
    %2327 = vsyncpa [#allocation3], 1
    %2328 = vsyncpa [#allocation6], 1
    %2329 = vsyncpa [#allocation9], 1
    %2330 = vsyncpa [#allocation4], 1

</llo_original>
